<compile_context>
chip_gen: v7x
topology: tpu7x:2x2x1
jax: 0.10.0
libtpu: 0.0.40
codegen_flags: <defaults>
</compile_context>

<pallas_src>
import math

import jax
import jax.numpy as jnp
from jax.experimental import pallas as pl
from jax.experimental.pallas import tpu as pltpu


_SQRT_2_OVER_PI = math.sqrt(2.0 / math.pi)


def _gelu_tanh(x):
    # PyTorch GELU(approximate='tanh'); used in both kernel and reference.
    return 0.5 * x * (1.0 + jnp.tanh(_SQRT_2_OVER_PI * (x + 0.044715 * x * x * x)))


def _tile_lanes(x, reps):
    # Exact lane-axis tiling via concatenation (avoids jnp.tile's internal
    # sublane->lane reshape, which Mosaic may not support for arbitrary widths).
    out = x
    done = 1
    while done * 2 <= reps:
        out = jnp.concatenate([out, out], axis=1)
        done *= 2
    if done < reps:
        out = jnp.concatenate([out] + [x] * (reps - done), axis=1)
    return out


def _make_pair_embed_kernel(n_layers, eps):
    def kernel(*refs):
        fi_ref, fj_ref = refs[0], refs[1]
        w_refs = refs[2:2 + 2 * n_layers]
        o_ref = refs[-1]

        fi = fi_ref[0]                      # (7, blk_l): particle-i feats per pair
        fj_small = fj_ref[0]                # (7, P):     per-particle feats
        blk_l = fi.shape[-1]
        p_len = fj_small.shape[-1]
        fj = _tile_lanes(fj_small, blk_l // p_len)   # (7, blk_l): particle-j feats per pair

        pti, rapi, phii = fi[0:1], fi[1:2], fi[2:3]
        pxi, pyi, pzi, ei = fi[3:4], fi[4:5], fi[5:6], fi[6:7]
        ptj, rapj, phij = fj[0:1], fj[1:2], fj[2:3]
        pxj, pyj, pzj, ej = fj[3:4], fj[4:5], fj[5:6], fj[6:7]

        # delta_phi(a, b) = (a - b + pi) % (2*pi) - pi   (floor-mod, divisor > 0)
        two_pi = 2.0 * math.pi
        d = phii - phij + math.pi
        dphi = d - two_pi * jnp.floor(d / two_pi) - math.pi
        drap = rapi - rapj
        delta = jnp.sqrt(drap * drap + dphi * dphi)
        lndelta = jnp.log(jnp.maximum(delta, eps))

        ptmin = jnp.minimum(pti, ptj)
        lnkt = jnp.log(jnp.maximum(ptmin * delta, eps))
        lnz = jnp.log(jnp.maximum(ptmin / jnp.maximum(pti + ptj, eps), eps))

        es = ei + ej
        pxs = pxi + pxj
        pys = pyi + pyj
        pzs = pzi + pzj
        m2 = jnp.maximum(es * es - (pxs * pxs + pys * pys + pzs * pzs), eps)
        lnm2 = jnp.log(m2)

        # pairwise_lv_fts(num_outputs=4): [lnkt, lnz, lndelta, lnm2]
        h = jnp.concatenate([lnkt, lnz, lndelta, lnm2], axis=0)   # (4, blk_l)

        # Folded (eval-mode) BN -> conv1x1 -> BN -> GELU stack; last act = Identity
        # (use_pre_activation_pair=True).
        for layer in range(n_layers):
            a_ref = w_refs[2 * layer]
            c_ref = w_refs[2 * layer + 1]
            h = jnp.dot(a_ref[...], h,
                        precision=jax.lax.Precision.HIGHEST,
                        preferred_element_type=jnp.float32) + c_ref[...]
            if layer != n_layers - 1:
                h = _gelu_tanh(h)

        o_ref[0] = h.astype(o_ref.dtype)

    return kernel


# ----------------------------- parameters ------------------------------------


def init_pair_embed_params(key, input_dim=4, dims=(32, 32, 8)):
    """Random parameters mirroring the PyTorch module (eval-mode BN stats)."""
    def nxt(k):
        return jax.random.split(k)

    p = {}
    k, key = nxt(key); p['bn0_gamma'] = 1.0 + 0.1 * jax.random.normal(k, (input_dim,))
    k, key = nxt(key); p['bn0_beta'] = 0.1 * jax.random.normal(k, (input_dim,))
    k, key = nxt(key); p['bn0_mean'] = 0.1 * jax.random.normal(k, (input_dim,))
    k, key = nxt(key); p['bn0_var'] = jnp.abs(1.0 + 0.1 * jax.random.normal(k, (input_dim,)))

    conv_w, conv_b, bn_g, bn_b, bn_m, bn_v = [], [], [], [], [], []
    prev = input_dim
    for d in dims:
        k, key = nxt(key); conv_w.append(jax.random.normal(k, (d, prev)) / math.sqrt(prev))
        k, key = nxt(key); conv_b.append(0.1 * jax.random.normal(k, (d,)))
        k, key = nxt(key); bn_g.append(1.0 + 0.1 * jax.random.normal(k, (d,)))
        k, key = nxt(key); bn_b.append(0.1 * jax.random.normal(k, (d,)))
        k, key = nxt(key); bn_m.append(0.1 * jax.random.normal(k, (d,)))
        k, key = nxt(key); bn_v.append(jnp.abs(1.0 + 0.1 * jax.random.normal(k, (d,))))
        prev = d
    p.update(conv_w=conv_w, conv_b=conv_b, bn_gamma=bn_g, bn_beta=bn_b,
             bn_mean=bn_m, bn_var=bn_v)
    return p


def _bn_affine(gamma, beta, mean, var, eps=1e-5):
    scale = gamma / jnp.sqrt(var + eps)
    return scale, beta - mean * scale


def fold_pair_embed_params(p):
    """Fold eval-mode BatchNorms into the 1x1 conv weights: list of (A, c)."""
    s0, t0 = _bn_affine(p['bn0_gamma'], p['bn0_beta'], p['bn0_mean'], p['bn0_var'])
    folded = []
    for layer, (w, b) in enumerate(zip(p['conv_w'], p['conv_b'])):
        s, t = _bn_affine(p['bn_gamma'][layer], p['bn_beta'][layer],
                          p['bn_mean'][layer], p['bn_var'][layer])
        if layer == 0:
            a = (s[:, None] * w) * s0[None, :]
            c = s * (w @ t0 + b) + t
        else:
            a = s[:, None] * w
            c = s * b + t
        folded.append((a.astype(jnp.float32), c[:, None].astype(jnp.float32)))
    return folded


# ------------------------------- wrapper --------------------------------------


def pair_embed_forward(x, params, *, eps=1e-8, i_tile=None, interpret=False):
    """PairEmbed.forward for x: (N, 4, P) four-momenta (px, py, pz, E).

    Returns y: (N, out_dim, P, P) — the pairwise attention-bias tensor.
    """
    n, four, p_len = x.shape
    assert four == 4, "expects (N, 4, P) four-momenta (px, py, pz, E)"
    x = x.astype(jnp.float32)

    # --- per-particle kinematics, O(N*P), plain JAX (atan2 stays outside) ---
    px, py, pz, en = x[:, 0], x[:, 1], x[:, 2], x[:, 3]
    pt = jnp.sqrt(px * px + py * py)
    rap = 0.5 * jnp.log(1.0 + 2.0 * pz / jnp.maximum(en - pz, 1e-20))
    phi = jnp.arctan2(py, px)
    feats = jnp.stack([pt, rap, phi, px, py, pz, en], axis=1)     # (N, 7, P)
    # i-role copy: pair index l = i*P + j must read particle i = l // P.
    # Materialised in the wrapper (exact copies) because Mosaic has no general
    # sublane->lane reshape for arbitrary P; the j-role copy is tiled in-kernel.
    feats_i = jnp.repeat(feats, p_len, axis=2)                    # (N, 7, P*P)

    folded = fold_pair_embed_params(params)
    out_dim = folded[-1][0].shape[0]
    n_layers = len(folded)
    total_l = p_len * p_len

    if i_tile is None:
        i_tile = p_len
    assert p_len % i_tile == 0
    assert i_tile == p_len or (i_tile * p_len) % 128 == 0, \
        "pair-block lane width must be lane-aligned or full extent"
    n_it = p_len // i_tile
    blk_l = i_tile * p_len

    weight_args, weight_specs = [], []
    for a, c in folded:
        weight_args += [a, c]
        weight_specs += [
            pl.BlockSpec(a.shape, lambda b, it: (0, 0)),
            pl.BlockSpec(c.shape, lambda b, it: (0, 0)),
        ]

    kernel = _make_pair_embed_kernel(n_layers=n_layers, eps=eps)

    y_flat = pl.pallas_call(
        kernel,
        out_shape=jax.ShapeDtypeStruct((n, out_dim, total_l), jnp.float32),
        grid_spec=pltpu.PrefetchScalarGridSpec(
            num_scalar_prefetch=0,
            grid=(n, n_it),
            in_specs=[
                pl.BlockSpec((1, 7, blk_l), lambda b, it: (b, 0, it)),   # i-role feats
                pl.BlockSpec((1, 7, p_len), lambda b, it: (b, 0, 0)),    # j-role feats
            ] + weight_specs,
            out_specs=pl.BlockSpec((1, out_dim, blk_l), lambda b, it: (b, 0, it)),
        ),
        compiler_params=pltpu.CompilerParams(
            dimension_semantics=("parallel", "parallel"),
        ),
        interpret=interpret,
    )(feats_i, feats, *weight_args)

    return y_flat.reshape(n, out_dim, p_len, p_len)


# --------------------------- pure-JAX reference --------------------------------


def pair_embed_reference(x, params, eps=1e-8):
    """Faithful eval-mode reference of PairEmbed.forward (dense equivalent of the
    is_symmetric path: features are symmetric, so dense == tril+scatter)."""
    n, _, p_len = x.shape
    xi = x[:, :, :, None]                                   # (N,4,P,1)
    xj = x[:, :, None, :]                                   # (N,4,1,P)

    def pt_rap_phi(v):
        pxv, pyv, pzv, ev = v[:, 0:1], v[:, 1:2], v[:, 2:3], v[:, 3:4]
        ptv = jnp.sqrt(pxv * pxv + pyv * pyv)
        rapv = 0.5 * jnp.log(1.0 + 2.0 * pzv / jnp.maximum(ev - pzv, 1e-20))
        phiv = jnp.arctan2(pyv, pxv)
        return ptv, rapv, phiv

    pti, rapi, phii = pt_rap_phi(xi)
    ptj, rapj, phij = pt_rap_phi(xj)
    dphi = jnp.mod(phii - phij + math.pi, 2.0 * math.pi) - math.pi
    delta = jnp.sqrt((rapi - rapj) ** 2 + dphi ** 2)
    lndelta = jnp.log(jnp.maximum(delta, eps))
    ptmin = jnp.minimum(pti, ptj)
    lnkt = jnp.log(jnp.maximum(ptmin * delta, eps))
    lnz = jnp.log(jnp.maximum(ptmin / jnp.maximum(pti + ptj, eps), eps))
    xij = xi + xj
    m2 = jnp.maximum(
        xij[:, 3:4] ** 2 - (xij[:, 0:1] ** 2 + xij[:, 1:2] ** 2 + xij[:, 2:3] ** 2), eps)
    lnm2 = jnp.log(m2)
    fts = jnp.concatenate([lnkt, lnz, lndelta, lnm2], axis=1)   # (N,4,P,P)
    h = fts.reshape(n, 4, p_len * p_len)

    s0, t0 = _bn_affine(params['bn0_gamma'], params['bn0_beta'],
                        params['bn0_mean'], params['bn0_var'])
    h = h * s0[None, :, None] + t0[None, :, None]
    n_layers = len(params['conv_w'])
    for layer in range(n_layers):
        w, b = params['conv_w'][layer], params['conv_b'][layer]
        h = jnp.einsum('oc,ncl->nol', w, h,
                       precision=jax.lax.Precision.HIGHEST) + b[None, :, None]
        s, t = _bn_affine(params['bn_gamma'][layer], params['bn_beta'][layer],
                          params['bn_mean'][layer], params['bn_var'][layer])
        h = h * s[None, :, None] + t[None, :, None]
        if layer != n_layers - 1:
            h = _gelu_tanh(h)
    out_dim = params['conv_w'][-1].shape[0]
    return h.reshape(n, out_dim, p_len, p_len)


# ---------------------------------- demo ---------------------------------------


if __name__ == "__main__":
    key = jax.random.PRNGKey(0)
    k_x, k_p = jax.random.split(key)

    N, P = 2, 16                 # batch, particles (seq_len)
    dims = (32, 32, 8)           # conv dims; out_dim = 8 (== num attention heads)

    # Four-momenta with E = sqrt(|p|^2 + m^2) so rapidity / m^2 are well-behaved.
    p3 = jax.random.normal(k_x, (N, 3, P), dtype=jnp.float32)
    en = jnp.sqrt(jnp.sum(p3 * p3, axis=1, keepdims=True) + 0.25)
    x = jnp.concatenate([p3, en], axis=1)                          # (N, 4, P)

    params = init_pair_embed_params(k_p, input_dim=4, dims=dims)

    y = pair_embed_forward(x, params)
    y = jax.block_until_ready(y)

    assert y.shape == (N, dims[-1], P, P) and y.dtype == jnp.float32
    assert bool(jnp.all(jnp.isfinite(y)))

    y_ref = pair_embed_reference(x, params)
    scale = float(jnp.max(jnp.abs(y_ref))) + 1.0
    max_err = float(jnp.max(jnp.abs(y - y_ref)))
    assert max_err <= 2e-2 * scale, f"mismatch: max_err={max_err}, scale={scale}"

    # is_symmetric configuration -> output symmetric in (i, j)
    assert bool(jnp.allclose(y, jnp.swapaxes(y, -1, -2), atol=2e-2 * scale))

    print("KERNEL_OK")
</pallas_src>

<mosaic_0001>
module attributes {stable_mosaic.version = 11 : i64} {
  func.func @kernel(%arg0: i32, %arg1: i32, %arg2: memref<1x7x256xf32, #tpu.memory_space<vmem>>, %arg3: memref<1x7x16xf32, #tpu.memory_space<vmem>>, %arg4: memref<32x4xf32, #tpu.memory_space<vmem>>, %arg5: memref<32x1xf32, #tpu.memory_space<vmem>>, %arg6: memref<32x32xf32, #tpu.memory_space<vmem>>, %arg7: memref<32x1xf32, #tpu.memory_space<vmem>>, %arg8: memref<8x32xf32, #tpu.memory_space<vmem>>, %arg9: memref<8x1xf32, #tpu.memory_space<vmem>>, %arg10: memref<1x8x256xf32, #tpu.memory_space<vmem>>) attributes {dimension_semantics = [#tpu.dimension_semantics<parallel>, #tpu.dimension_semantics<parallel>], iteration_bounds = array<i64: 2, 1>, scalar_prefetch = 0 : i64, scratch_operands = 0 : i64, tpu.core_type = #tpu.core_type<tc>, window_params = [{transform_indices = @transform_0, window_bounds = array<i64: 1, 7, 256>}, {transform_indices = @transform_1, window_bounds = array<i64: 1, 7, 16>}, {pipeline_mode = #tpu.pipeline_mode<synchronous>, transform_indices = @transform_2, window_bounds = array<i64: 32, 4>}, {pipeline_mode = #tpu.pipeline_mode<synchronous>, transform_indices = @transform_3, window_bounds = array<i64: 32, 1>}, {pipeline_mode = #tpu.pipeline_mode<synchronous>, transform_indices = @transform_4, window_bounds = array<i64: 32, 32>}, {pipeline_mode = #tpu.pipeline_mode<synchronous>, transform_indices = @transform_5, window_bounds = array<i64: 32, 1>}, {pipeline_mode = #tpu.pipeline_mode<synchronous>, transform_indices = @transform_6, window_bounds = array<i64: 8, 32>}, {pipeline_mode = #tpu.pipeline_mode<synchronous>, transform_indices = @transform_7, window_bounds = array<i64: 8, 1>}, {transform_indices = @transform_8, window_bounds = array<i64: 1, 8, 256>}]} {
    %c0 = arith.constant 0 : index
    %c0_0 = arith.constant 0 : index
    %c0_1 = arith.constant 0 : index
    %0 = vector.load %arg2[%c0, %c0_0, %c0_1] : memref<1x7x256xf32, #tpu.memory_space<vmem>>, vector<1x7x256xf32>
    %1 = vector.shape_cast %0 : vector<1x7x256xf32> to vector<7x256xf32>
    %c0_2 = arith.constant 0 : index
    %c0_3 = arith.constant 0 : index
    %c0_4 = arith.constant 0 : index
    %2 = vector.load %arg3[%c0_2, %c0_3, %c0_4] : memref<1x7x16xf32, #tpu.memory_space<vmem>>, vector<1x7x16xf32>
    %3 = vector.shape_cast %2 : vector<1x7x16xf32> to vector<7x16xf32>
    %4 = tpu.concatenate %3, %3 in 1 : vector<7x16xf32>, vector<7x16xf32> -> vector<7x32xf32>
    %5 = tpu.concatenate %4, %4 in 1 : vector<7x32xf32>, vector<7x32xf32> -> vector<7x64xf32>
    %6 = tpu.concatenate %5, %5 in 1 : vector<7x64xf32>, vector<7x64xf32> -> vector<7x128xf32>
    %7 = tpu.concatenate %6, %6 in 1 : vector<7x128xf32>, vector<7x128xf32> -> vector<7x256xf32>
    %8 = vector.extract_strided_slice %1 {offsets = [0, 0], sizes = [1, 256], strides = [1, 1]} : vector<7x256xf32> to vector<1x256xf32>
    %9 = vector.extract_strided_slice %1 {offsets = [1, 0], sizes = [1, 256], strides = [1, 1]} : vector<7x256xf32> to vector<1x256xf32>
    %10 = vector.extract_strided_slice %1 {offsets = [2, 0], sizes = [1, 256], strides = [1, 1]} : vector<7x256xf32> to vector<1x256xf32>
    %11 = vector.extract_strided_slice %1 {offsets = [3, 0], sizes = [1, 256], strides = [1, 1]} : vector<7x256xf32> to vector<1x256xf32>
    %12 = vector.extract_strided_slice %1 {offsets = [4, 0], sizes = [1, 256], strides = [1, 1]} : vector<7x256xf32> to vector<1x256xf32>
    %13 = vector.extract_strided_slice %1 {offsets = [5, 0], sizes = [1, 256], strides = [1, 1]} : vector<7x256xf32> to vector<1x256xf32>
    %14 = vector.extract_strided_slice %1 {offsets = [6, 0], sizes = [1, 256], strides = [1, 1]} : vector<7x256xf32> to vector<1x256xf32>
    %15 = vector.extract_strided_slice %7 {offsets = [0, 0], sizes = [1, 256], strides = [1, 1]} : vector<7x256xf32> to vector<1x256xf32>
    %16 = vector.extract_strided_slice %7 {offsets = [1, 0], sizes = [1, 256], strides = [1, 1]} : vector<7x256xf32> to vector<1x256xf32>
    %17 = vector.extract_strided_slice %7 {offsets = [2, 0], sizes = [1, 256], strides = [1, 1]} : vector<7x256xf32> to vector<1x256xf32>
    %18 = vector.extract_strided_slice %7 {offsets = [3, 0], sizes = [1, 256], strides = [1, 1]} : vector<7x256xf32> to vector<1x256xf32>
    %19 = vector.extract_strided_slice %7 {offsets = [4, 0], sizes = [1, 256], strides = [1, 1]} : vector<7x256xf32> to vector<1x256xf32>
    %20 = vector.extract_strided_slice %7 {offsets = [5, 0], sizes = [1, 256], strides = [1, 1]} : vector<7x256xf32> to vector<1x256xf32>
    %21 = vector.extract_strided_slice %7 {offsets = [6, 0], sizes = [1, 256], strides = [1, 1]} : vector<7x256xf32> to vector<1x256xf32>
    %22 = arith.subf %10, %17 : vector<1x256xf32>
    %cst = arith.constant 3.14159274 : f32
    %23 = vector.broadcast %cst : f32 to vector<1x256xf32>
    %24 = arith.addf %22, %23 : vector<1x256xf32>
    %cst_5 = arith.constant 6.28318548 : f32
    %25 = vector.broadcast %cst_5 : f32 to vector<1x256xf32>
    %26 = arith.divf %24, %25 : vector<1x256xf32>
    %27 = math.floor %26 : vector<1x256xf32>
    %cst_6 = arith.constant 6.28318548 : f32
    %28 = vector.broadcast %cst_6 : f32 to vector<1x256xf32>
    %29 = arith.mulf %28, %27 : vector<1x256xf32>
    %30 = arith.subf %24, %29 : vector<1x256xf32>
    %cst_7 = arith.constant 3.14159274 : f32
    %31 = vector.broadcast %cst_7 : f32 to vector<1x256xf32>
    %32 = arith.subf %30, %31 : vector<1x256xf32>
    %33 = arith.subf %9, %16 : vector<1x256xf32>
    %34 = arith.mulf %33, %33 : vector<1x256xf32>
    %35 = arith.mulf %32, %32 : vector<1x256xf32>
    %36 = arith.addf %34, %35 : vector<1x256xf32>
    %37 = math.sqrt %36 : vector<1x256xf32>
    %cst_8 = arith.constant 9.99999993E-9 : f32
    %38 = vector.broadcast %cst_8 : f32 to vector<1x256xf32>
    %39 = arith.maximumf %37, %38 : vector<1x256xf32>
    %40 = math.log %39 : vector<1x256xf32>
    %41 = arith.minimumf %8, %15 : vector<1x256xf32>
    %42 = arith.mulf %41, %37 : vector<1x256xf32>
    %cst_9 = arith.constant 9.99999993E-9 : f32
    %43 = vector.broadcast %cst_9 : f32 to vector<1x256xf32>
    %44 = arith.maximumf %42, %43 : vector<1x256xf32>
    %45 = math.log %44 : vector<1x256xf32>
    %46 = arith.addf %8, %15 : vector<1x256xf32>
    %cst_10 = arith.constant 9.99999993E-9 : f32
    %47 = vector.broadcast %cst_10 : f32 to vector<1x256xf32>
    %48 = arith.maximumf %46, %47 : vector<1x256xf32>
    %49 = arith.divf %41, %48 : vector<1x256xf32>
    %cst_11 = arith.constant 9.99999993E-9 : f32
    %50 = vector.broadcast %cst_11 : f32 to vector<1x256xf32>
    %51 = arith.maximumf %49, %50 : vector<1x256xf32>
    %52 = math.log %51 : vector<1x256xf32>
    %53 = arith.addf %14, %21 : vector<1x256xf32>
    %54 = arith.addf %11, %18 : vector<1x256xf32>
    %55 = arith.addf %12, %19 : vector<1x256xf32>
    %56 = arith.addf %13, %20 : vector<1x256xf32>
    %57 = arith.mulf %53, %53 : vector<1x256xf32>
    %58 = arith.mulf %54, %54 : vector<1x256xf32>
    %59 = arith.mulf %55, %55 : vector<1x256xf32>
    %60 = arith.addf %58, %59 : vector<1x256xf32>
    %61 = arith.mulf %56, %56 : vector<1x256xf32>
    %62 = arith.addf %60, %61 : vector<1x256xf32>
    %63 = arith.subf %57, %62 : vector<1x256xf32>
    %cst_12 = arith.constant 9.99999993E-9 : f32
    %64 = vector.broadcast %cst_12 : f32 to vector<1x256xf32>
    %65 = arith.maximumf %63, %64 : vector<1x256xf32>
    %66 = math.log %65 : vector<1x256xf32>
    %67 = tpu.concatenate %45, %52, %40, %66 in 0 : vector<1x256xf32>, vector<1x256xf32>, vector<1x256xf32>, vector<1x256xf32> -> vector<4x256xf32>
    %c0_13 = arith.constant 0 : index
    %c0_14 = arith.constant 0 : index
    %68 = vector.load %arg4[%c0_13, %c0_14] : memref<32x4xf32, #tpu.memory_space<vmem>>, vector<32x4xf32>
    %cst_15 = arith.constant dense<0.000000e+00> : vector<32x256xf32>
    %69 = tpu.matmul %68, %67, %cst_15 {dimension_numbers = #tpu.dot_dimension_numbers<[1], [0], [0], [1], [0, 0, 1, 1], [], []>, precision = #tpu.contract_precision<fp32>} : vector<32x4xf32>, vector<4x256xf32>, vector<32x256xf32> -> vector<32x256xf32>
    %c0_16 = arith.constant 0 : index
    %c0_17 = arith.constant 0 : index
    %70 = vector.load %arg5[%c0_16, %c0_17] : memref<32x1xf32, #tpu.memory_space<vmem>>, vector<32x1xf32>
    %71 = vector.broadcast %70 : vector<32x1xf32> to vector<32x256xf32>
    %72 = arith.addf %69, %71 : vector<32x256xf32>
    %cst_18 = arith.constant 5.000000e-01 : f32
    %73 = vector.broadcast %cst_18 : f32 to vector<32x256xf32>
    %74 = arith.mulf %73, %72 : vector<32x256xf32>
    %cst_19 = arith.constant 4.471500e-02 : f32
    %75 = vector.broadcast %cst_19 : f32 to vector<32x256xf32>
    %76 = arith.mulf %75, %72 : vector<32x256xf32>
    %77 = arith.mulf %76, %72 : vector<32x256xf32>
    %78 = arith.mulf %77, %72 : vector<32x256xf32>
    %79 = arith.addf %72, %78 : vector<32x256xf32>
    %cst_20 = arith.constant 0.797884583 : f32
    %80 = vector.broadcast %cst_20 : f32 to vector<32x256xf32>
    %81 = arith.mulf %80, %79 : vector<32x256xf32>
    %82 = math.tanh %81 : vector<32x256xf32>
    %cst_21 = arith.constant 1.000000e+00 : f32
    %83 = vector.broadcast %cst_21 : f32 to vector<32x256xf32>
    %84 = arith.addf %83, %82 : vector<32x256xf32>
    %85 = arith.mulf %74, %84 : vector<32x256xf32>
    %c0_22 = arith.constant 0 : index
    %c0_23 = arith.constant 0 : index
    %86 = vector.load %arg6[%c0_22, %c0_23] : memref<32x32xf32, #tpu.memory_space<vmem>>, vector<32x32xf32>
    %cst_24 = arith.constant dense<0.000000e+00> : vector<32x256xf32>
    %87 = tpu.matmul %86, %85, %cst_24 {dimension_numbers = #tpu.dot_dimension_numbers<[1], [0], [0], [1], [0, 0, 1, 1], [], []>, precision = #tpu.contract_precision<fp32>} : vector<32x32xf32>, vector<32x256xf32>, vector<32x256xf32> -> vector<32x256xf32>
    %c0_25 = arith.constant 0 : index
    %c0_26 = arith.constant 0 : index
    %88 = vector.load %arg7[%c0_25, %c0_26] : memref<32x1xf32, #tpu.memory_space<vmem>>, vector<32x1xf32>
    %89 = vector.broadcast %88 : vector<32x1xf32> to vector<32x256xf32>
    %90 = arith.addf %87, %89 : vector<32x256xf32>
    %cst_27 = arith.constant 5.000000e-01 : f32
    %91 = vector.broadcast %cst_27 : f32 to vector<32x256xf32>
    %92 = arith.mulf %91, %90 : vector<32x256xf32>
    %cst_28 = arith.constant 4.471500e-02 : f32
    %93 = vector.broadcast %cst_28 : f32 to vector<32x256xf32>
    %94 = arith.mulf %93, %90 : vector<32x256xf32>
    %95 = arith.mulf %94, %90 : vector<32x256xf32>
    %96 = arith.mulf %95, %90 : vector<32x256xf32>
    %97 = arith.addf %90, %96 : vector<32x256xf32>
    %cst_29 = arith.constant 0.797884583 : f32
    %98 = vector.broadcast %cst_29 : f32 to vector<32x256xf32>
    %99 = arith.mulf %98, %97 : vector<32x256xf32>
    %100 = math.tanh %99 : vector<32x256xf32>
    %cst_30 = arith.constant 1.000000e+00 : f32
    %101 = vector.broadcast %cst_30 : f32 to vector<32x256xf32>
    %102 = arith.addf %101, %100 : vector<32x256xf32>
    %103 = arith.mulf %92, %102 : vector<32x256xf32>
    %c0_31 = arith.constant 0 : index
    %c0_32 = arith.constant 0 : index
    %104 = vector.load %arg8[%c0_31, %c0_32] : memref<8x32xf32, #tpu.memory_space<vmem>>, vector<8x32xf32>
    %cst_33 = arith.constant dense<0.000000e+00> : vector<8x256xf32>
    %105 = tpu.matmul %104, %103, %cst_33 {dimension_numbers = #tpu.dot_dimension_numbers<[1], [0], [0], [1], [0, 0, 1, 1], [], []>, precision = #tpu.contract_precision<fp32>} : vector<8x32xf32>, vector<32x256xf32>, vector<8x256xf32> -> vector<8x256xf32>
    %c0_34 = arith.constant 0 : index
    %c0_35 = arith.constant 0 : index
    %106 = vector.load %arg9[%c0_34, %c0_35] : memref<8x1xf32, #tpu.memory_space<vmem>>, vector<8x1xf32>
    %107 = vector.broadcast %106 : vector<8x1xf32> to vector<8x256xf32>
    %108 = arith.addf %105, %107 : vector<8x256xf32>
    %c0_36 = arith.constant 0 : index
    %c0_37 = arith.constant 0 : index
    %c0_38 = arith.constant 0 : index
    %109 = vector.load %arg10[%c0_36, %c0_37, %c0_38] : memref<1x8x256xf32, #tpu.memory_space<vmem>>, vector<1x8x256xf32>
    %110 = vector.shape_cast %109 : vector<1x8x256xf32> to vector<8x256xf32>
    %111 = vector.shape_cast %108 : vector<8x256xf32> to vector<1x8x256xf32>
    tpu.vector_store %arg10[%c0_36, %c0_37, %c0_38], %111 {strides = array<i32>} : memref<1x8x256xf32, #tpu.memory_space<vmem>>, vector<1x8x256xf32>,
    return
  }
  func.func @transform_0(%arg0: i32, %arg1: i32) -> (i32, i32, i32) {
    %c0_i32 = arith.constant 0 : i32
    %c0_i32_0 = arith.constant 0 : i32
    return %arg0, %c0_i32, %arg1 : i32, i32, i32
  }
  func.func @transform_1(%arg0: i32, %arg1: i32) -> (i32, i32, i32) {
    %c0_i32 = arith.constant 0 : i32
    %c0_i32_0 = arith.constant 0 : i32
    %c0_i32_1 = arith.constant 0 : i32
    return %arg0, %c0_i32, %c0_i32_0 : i32, i32, i32
  }
  func.func @transform_2(%arg0: i32, %arg1: i32) -> (i32, i32) {
    %c0_i32 = arith.constant 0 : i32
    %c0_i32_0 = arith.constant 0 : i32
    %c0_i32_1 = arith.constant 0 : i32
    return %c0_i32, %c0_i32_0 : i32, i32
  }
  func.func @transform_3(%arg0: i32, %arg1: i32) -> (i32, i32) {
    %c0_i32 = arith.constant 0 : i32
    %c0_i32_0 = arith.constant 0 : i32
    %c0_i32_1 = arith.constant 0 : i32
    return %c0_i32, %c0_i32_0 : i32, i32
  }
  func.func @transform_4(%arg0: i32, %arg1: i32) -> (i32, i32) {
    %c0_i32 = arith.constant 0 : i32
    %c0_i32_0 = arith.constant 0 : i32
    %c0_i32_1 = arith.constant 0 : i32
    return %c0_i32, %c0_i32_0 : i32, i32
  }
  func.func @transform_5(%arg0: i32, %arg1: i32) -> (i32, i32) {
    %c0_i32 = arith.constant 0 : i32
    %c0_i32_0 = arith.constant 0 : i32
    %c0_i32_1 = arith.constant 0 : i32
    return %c0_i32, %c0_i32_0 : i32, i32
  }
  func.func @transform_6(%arg0: i32, %arg1: i32) -> (i32, i32) {
    %c0_i32 = arith.constant 0 : i32
    %c0_i32_0 = arith.constant 0 : i32
    %c0_i32_1 = arith.constant 0 : i32
    return %c0_i32, %c0_i32_0 : i32, i32
  }
  func.func @transform_7(%arg0: i32, %arg1: i32) -> (i32, i32) {
    %c0_i32 = arith.constant 0 : i32
    %c0_i32_0 = arith.constant 0 : i32
    %c0_i32_1 = arith.constant 0 : i32
    return %c0_i32, %c0_i32_0 : i32, i32
  }
  func.func @transform_8(%arg0: i32, %arg1: i32) -> (i32, i32, i32) {
    %c0_i32 = arith.constant 0 : i32
    %c0_i32_0 = arith.constant 0 : i32
    return %arg0, %c0_i32, %arg1 : i32, i32, i32
  }
}

</mosaic_0001>

<llo_original>
// kernel: tpu_custom_call.1
$region0: #{tpu_custom_call.1}
  #allocation0 [shape = 'u32[]', space=smem, size = 0x4, offset = 0x4, fixed_abs, tag = 'smem constant byte address 0x4 - core index']
  #allocation1 [shape = 'u32[144,128]{1,0:T(1,128)}', space=vmem, size = 0x12000, scoped, tag = 'internal scratch']
  %s0 = inlined_call_operand.vmem [shape: f32[2,7,256], index: 0, kind: input, shape index: {}]
  %s1 = inlined_call_operand.vmem [shape: f32[2,7,16], index: 1, kind: input, shape index: {}]
  %s2 = inlined_call_operand.vmem [shape: f32[32,4], index: 2, kind: input, shape index: {}]
  %s3 = inlined_call_operand.vmem [shape: f32[32,1], index: 3, kind: input, shape index: {}]
  %s4 = inlined_call_operand.vmem [shape: f32[32,32], index: 4, kind: input, shape index: {}]
  %s5 = inlined_call_operand.vmem [shape: f32[32,1], index: 5, kind: input, shape index: {}]
  %s6 = inlined_call_operand.vmem [shape: f32[8,32], index: 6, kind: input, shape index: {}]
  %s7 = inlined_call_operand.vmem [shape: f32[8,1], index: 7, kind: input, shape index: {}]
  %s8 = inlined_call_operand.hbm [shape: f32[2,8,256], index: 8, kind: output, shape index: {}]
  %s9 = sld [smem:[#allocation0]]
  $region65: #{tpu_custom_call.1} parent=0
    _
  %s11 = ssub.s32 1, %s9
  %s12 = scalar_select 0, %s11, %s9
  $region1: #{tpu_custom_call.1} parent=0
    #allocation2 [shape = 'u8[16384]{0}', space=vmem, size = 0x4000, scoped, tag = 'output window, operand 0']
    #allocation3 [shape = 's32[2]{0}', space=sflag, size = 0x8, scoped, tag = 'scoped memory for tpu_custom_call.1']
    %13 = vsyncpa [#allocation3], 0
    %s14 = scalar_lea.sflag [#allocation3], 1
    %15 = vsyncpa %s14, 0
    loop: start=0, step=1, limit=4
    $region2: #{tpu_custom_call.1} parent=1 // loop_pre_header
      _
    $region3: #{tpu_custom_call.1} parent=1 // loop_header
      %s17 = sphi 0, %s21
      %p18 = scmp.ge.s32.totalorder %s17, 4
      %s24 = sphi 0, %s36
      %s25 = sphi 0, %s32
      %s26 = sphi 0, %s24
      %s27 = sphi 0, %s25
      %s28 = sphi 0, %s26
      %s29 = sphi 0, %s27
      %s41 = sphi 0, %s43
      %s44 = sphi 0, %s41
      %s45 = sphi 0, %s44
      %s61 = sphi 0, %s45
      %s67 = sphi 0, %s69
      %s70 = sphi 0, %s67
      %s71 = sphi 0, %s70
      %s87 = sphi 0, %s71
      %s91 = sphi 0, %s91
      %s93 = sphi 0, %s91
      %s94 = sphi 0, %s93
      %s108 = sphi 0, %s94
      %s112 = sphi 0, %s112
      %s114 = sphi 0, %s112
      %s115 = sphi 0, %s114
      %s129 = sphi 0, %s115
      %s133 = sphi 0, %s133
      %s135 = sphi 0, %s133
      %s136 = sphi 0, %s135
      %s150 = sphi 0, %s136
      %s154 = sphi 0, %s154
      %s156 = sphi 0, %s154
      %s157 = sphi 0, %s156
      %s171 = sphi 0, %s157
      %s175 = sphi 0, %s175
      %s177 = sphi 0, %s175
      %s178 = sphi 0, %s177
      %s192 = sphi 0, %s178
      %s196 = sphi 0, %s196
      %s198 = sphi 0, %s196
      %s199 = sphi 0, %s198
      %s213 = sphi 0, %s199
      %s221 = sphi 0, %s223
      %s224 = sphi 0, %s221
      %s225 = sphi 0, %s224
      %s241 = sphi 0, %s225
    $region4: #{tpu_custom_call.1} parent=1 // loop_header_branch
      %20 = sbr.rel (%p18) target = $region8
    $region5: #{tpu_custom_call.1} parent=1 // loop_body
      %s22 = ssub.s32 %s17, 1
      %s23 = ssub.s32 %s17, 2
      %s30 = sadd.s32 1, %s25
      %p31 = scmp.ge.s32.totalorder %s30, 1
      %s32 = scalar_select %p31, 0, %s30
      %s33 = sadd.s32 1, %s24
      %s34 = scalar_select %p31, %s33, %s24
      %p35 = scmp.ge.s32.totalorder %s34, 2
      %s36 = scalar_select %p35, 0, %s34
      %s37 = ssub.s32 %s24, %s36
      %s38 = ssub.s32 %s25, %s32
      %s39 = sor.u32 %s37, %s38
      %p40 = scmp.eq.s32.totalorder %s39, 0
      %s42 = sadd.s32 %s41, 1
      %s43 = scalar_select %p40, %s41, %s42
      %p46 = pneg %p40
      %p47 = scmp.eq.s32.totalorder %s17, 1
      %p48 = por %p46, %p47
      %p49 = scmp.ne.s32.totalorder %s41, %s44
      %p50 = scmp.eq.s32.totalorder %s17, 0
      %p51 = por %p49, %p50
      %p52 = scmp.ne.s32.totalorder %s41, %s44
      %p53 = scmp.eq.s32.totalorder %s22, 1
      %p54 = por %p52, %p53
      %p55 = scmp.ne.s32.totalorder %s44, %s45
      %p56 = scmp.eq.s32.totalorder %s22, 0
      %p57 = por %p55, %p56
      %p58 = scmp.ne.s32.totalorder %s44, %s45
      %p59 = scmp.eq.s32.totalorder %s23, 1
      %p60 = por %p58, %p59
      %p62 = scmp.ne.s32.totalorder %s45, %s61
      %p63 = scmp.eq.s32.totalorder %s23, 0
      %p64 = por %p62, %p63
      %s65 = ssub.s32 %s24, %s36
      %p66 = scmp.eq.s32.totalorder %s65, 0
      %s68 = sadd.s32 %s67, 1
      %s69 = scalar_select %p66, %s67, %s68
      %p72 = pneg %p66
      %p73 = scmp.eq.s32.totalorder %s17, 1
      %p74 = por %p72, %p73
      %p75 = scmp.ne.s32.totalorder %s67, %s70
      %p76 = scmp.eq.s32.totalorder %s17, 0
      %p77 = por %p75, %p76
      %p78 = scmp.ne.s32.totalorder %s67, %s70
      %p79 = scmp.eq.s32.totalorder %s22, 1
      %p80 = por %p78, %p79
      %p81 = scmp.ne.s32.totalorder %s70, %s71
      %p82 = scmp.eq.s32.totalorder %s22, 0
      %p83 = por %p81, %p82
      %p84 = scmp.ne.s32.totalorder %s70, %s71
      %p85 = scmp.eq.s32.totalorder %s23, 1
      %p86 = por %p84, %p85
      %p88 = scmp.ne.s32.totalorder %s71, %s87
      %p89 = scmp.eq.s32.totalorder %s23, 0
      %p90 = por %p88, %p89
      %s92 = sadd.s32 %s91, 1
      %p95 = scmp.eq.s32.totalorder %s17, 1
      %p96 = scmp.ne.s32.totalorder %s91, %s93
      %p97 = scmp.eq.s32.totalorder %s17, 0
      %p98 = por %p96, %p97
      %p99 = scmp.ne.s32.totalorder %s91, %s93
      %p100 = scmp.eq.s32.totalorder %s22, 1
      %p101 = por %p99, %p100
      %p102 = scmp.ne.s32.totalorder %s93, %s94
      %p103 = scmp.eq.s32.totalorder %s22, 0
      %p104 = por %p102, %p103
      %p105 = scmp.ne.s32.totalorder %s93, %s94
      %p106 = scmp.eq.s32.totalorder %s23, 1
      %p107 = por %p105, %p106
      %p109 = scmp.ne.s32.totalorder %s94, %s108
      %p110 = scmp.eq.s32.totalorder %s23, 0
      %p111 = por %p109, %p110
      %s113 = sadd.s32 %s112, 1
      %p116 = scmp.eq.s32.totalorder %s17, 1
      %p117 = scmp.ne.s32.totalorder %s112, %s114
      %p118 = scmp.eq.s32.totalorder %s17, 0
      %p119 = por %p117, %p118
      %p120 = scmp.ne.s32.totalorder %s112, %s114
      %p121 = scmp.eq.s32.totalorder %s22, 1
      %p122 = por %p120, %p121
      %p123 = scmp.ne.s32.totalorder %s114, %s115
      %p124 = scmp.eq.s32.totalorder %s22, 0
      %p125 = por %p123, %p124
      %p126 = scmp.ne.s32.totalorder %s114, %s115
      %p127 = scmp.eq.s32.totalorder %s23, 1
      %p128 = por %p126, %p127
      %p130 = scmp.ne.s32.totalorder %s115, %s129
      %p131 = scmp.eq.s32.totalorder %s23, 0
      %p132 = por %p130, %p131
      %s134 = sadd.s32 %s133, 1
      %p137 = scmp.eq.s32.totalorder %s17, 1
      %p138 = scmp.ne.s32.totalorder %s133, %s135
      %p139 = scmp.eq.s32.totalorder %s17, 0
      %p140 = por %p138, %p139
      %p141 = scmp.ne.s32.totalorder %s133, %s135
      %p142 = scmp.eq.s32.totalorder %s22, 1
      %p143 = por %p141, %p142
      %p144 = scmp.ne.s32.totalorder %s135, %s136
      %p145 = scmp.eq.s32.totalorder %s22, 0
      %p146 = por %p144, %p145
      %p147 = scmp.ne.s32.totalorder %s135, %s136
      %p148 = scmp.eq.s32.totalorder %s23, 1
      %p149 = por %p147, %p148
      %p151 = scmp.ne.s32.totalorder %s136, %s150
      %p152 = scmp.eq.s32.totalorder %s23, 0
      %p153 = por %p151, %p152
      %s155 = sadd.s32 %s154, 1
      %p158 = scmp.eq.s32.totalorder %s17, 1
      %p159 = scmp.ne.s32.totalorder %s154, %s156
      %p160 = scmp.eq.s32.totalorder %s17, 0
      %p161 = por %p159, %p160
      %p162 = scmp.ne.s32.totalorder %s154, %s156
      %p163 = scmp.eq.s32.totalorder %s22, 1
      %p164 = por %p162, %p163
      %p165 = scmp.ne.s32.totalorder %s156, %s157
      %p166 = scmp.eq.s32.totalorder %s22, 0
      %p167 = por %p165, %p166
      %p168 = scmp.ne.s32.totalorder %s156, %s157
      %p169 = scmp.eq.s32.totalorder %s23, 1
      %p170 = por %p168, %p169
      %p172 = scmp.ne.s32.totalorder %s157, %s171
      %p173 = scmp.eq.s32.totalorder %s23, 0
      %p174 = por %p172, %p173
      %s176 = sadd.s32 %s175, 1
      %p179 = scmp.eq.s32.totalorder %s17, 1
      %p180 = scmp.ne.s32.totalorder %s175, %s177
      %p181 = scmp.eq.s32.totalorder %s17, 0
      %p182 = por %p180, %p181
      %p183 = scmp.ne.s32.totalorder %s175, %s177
      %p184 = scmp.eq.s32.totalorder %s22, 1
      %p185 = por %p183, %p184
      %p186 = scmp.ne.s32.totalorder %s177, %s178
      %p187 = scmp.eq.s32.totalorder %s22, 0
      %p188 = por %p186, %p187
      %p189 = scmp.ne.s32.totalorder %s177, %s178
      %p190 = scmp.eq.s32.totalorder %s23, 1
      %p191 = por %p189, %p190
      %p193 = scmp.ne.s32.totalorder %s178, %s192
      %p194 = scmp.eq.s32.totalorder %s23, 0
      %p195 = por %p193, %p194
      %s197 = sadd.s32 %s196, 1
      %p200 = scmp.eq.s32.totalorder %s17, 1
      %p201 = scmp.ne.s32.totalorder %s196, %s198
      %p202 = scmp.eq.s32.totalorder %s17, 0
      %p203 = por %p201, %p202
      %p204 = scmp.ne.s32.totalorder %s196, %s198
      %p205 = scmp.eq.s32.totalorder %s22, 1
      %p206 = por %p204, %p205
      %p207 = scmp.ne.s32.totalorder %s198, %s199
      %p208 = scmp.eq.s32.totalorder %s22, 0
      %p209 = por %p207, %p208
      %p210 = scmp.ne.s32.totalorder %s198, %s199
      %p211 = scmp.eq.s32.totalorder %s23, 1
      %p212 = por %p210, %p211
      %p214 = scmp.ne.s32.totalorder %s199, %s213
      %p215 = scmp.eq.s32.totalorder %s23, 0
      %p216 = por %p214, %p215
      %s217 = ssub.s32 %s24, %s36
      %s218 = ssub.s32 %s25, %s32
      %s219 = sor.u32 %s217, %s218
      %p220 = scmp.eq.s32.totalorder %s219, 0
      %s222 = sadd.s32 %s221, 1
      %s223 = scalar_select %p220, %s221, %s222
      %p226 = pneg %p220
      %p227 = scmp.eq.s32.totalorder %s17, 1
      %p228 = por %p226, %p227
      %p229 = scmp.ne.s32.totalorder %s221, %s224
      %p230 = scmp.eq.s32.totalorder %s17, 0
      %p231 = por %p229, %p230
      %p232 = scmp.ne.s32.totalorder %s221, %s224
      %p233 = scmp.eq.s32.totalorder %s22, 1
      %p234 = por %p232, %p233
      %p235 = scmp.ne.s32.totalorder %s224, %s225
      %p236 = scmp.eq.s32.totalorder %s22, 0
      %p237 = por %p235, %p236
      %p238 = scmp.ne.s32.totalorder %s224, %s225
      %p239 = scmp.eq.s32.totalorder %s23, 1
      %p240 = por %p238, %p239
      %p242 = scmp.ne.s32.totalorder %s225, %s241
      %p243 = scmp.eq.s32.totalorder %s23, 0
      %p244 = por %p242, %p243
      %p245 = scmp.le.s32.totalorder 1, %s17
      %p246 = scmp.lt.s32.totalorder %s17, 3
      %p247 = pnand %p245, %p246
      %p248 = pneg %p247
      // Predicated region
      $region9: #{tpu_custom_call.1} parent=5 // pred_check
        _
      $region10: #{tpu_custom_call.1} parent=5 // pred_check_branch
        %250 = sbr.rel (%p247) target = $region12
      $region11: #{tpu_custom_call.1} parent=5 // pred_region
        %s251 = ssub.s32 %s17, 1
        // Predicated region
        $region13: #{tpu_custom_call.1} parent=11 // pred_check
          %p252 = pneg %p104
        $region14: #{tpu_custom_call.1} parent=11 // pred_check_branch
          %254 = sbr.rel (%p252) target = $region16
        $region15: #{tpu_custom_call.1} parent=11 // pred_region
          _
        $region16: #{tpu_custom_call.1} parent=11 // pred_fallthru
          _
        // Predicated region
        $region17: #{tpu_custom_call.1} parent=11 // pred_check
          %p255 = pneg %p125
        $region18: #{tpu_custom_call.1} parent=11 // pred_check_branch
          %257 = sbr.rel (%p255) target = $region20
        $region19: #{tpu_custom_call.1} parent=11 // pred_region
          _
        $region20: #{tpu_custom_call.1} parent=11 // pred_fallthru
          _
        // Predicated region
        $region21: #{tpu_custom_call.1} parent=11 // pred_check
          %p258 = pneg %p146
        $region22: #{tpu_custom_call.1} parent=11 // pred_check_branch
          %260 = sbr.rel (%p258) target = $region24
        $region23: #{tpu_custom_call.1} parent=11 // pred_region
          _
        $region24: #{tpu_custom_call.1} parent=11 // pred_fallthru
          _
        // Predicated region
        $region25: #{tpu_custom_call.1} parent=11 // pred_check
          %p261 = pneg %p167
        $region26: #{tpu_custom_call.1} parent=11 // pred_check_branch
          %263 = sbr.rel (%p261) target = $region28
        $region27: #{tpu_custom_call.1} parent=11 // pred_region
          _
        $region28: #{tpu_custom_call.1} parent=11 // pred_fallthru
          _
        // Predicated region
        $region29: #{tpu_custom_call.1} parent=11 // pred_check
          %p264 = pneg %p188
        $region30: #{tpu_custom_call.1} parent=11 // pred_check_branch
          %266 = sbr.rel (%p264) target = $region32
        $region31: #{tpu_custom_call.1} parent=11 // pred_region
          _
        $region32: #{tpu_custom_call.1} parent=11 // pred_fallthru
          _
        // Predicated region
        $region33: #{tpu_custom_call.1} parent=11 // pred_check
          %p267 = pneg %p209
        $region34: #{tpu_custom_call.1} parent=11 // pred_check_branch
          %269 = sbr.rel (%p267) target = $region36
        $region35: #{tpu_custom_call.1} parent=11 // pred_region
          _
        $region36: #{tpu_custom_call.1} parent=11 // pred_fallthru
          _
      $region12: #{tpu_custom_call.1} parent=5 // pred_fallthru
        _
      %p270 = scmp.lt.s32.totalorder %s17, 2
      // Predicated region
      $region37: #{tpu_custom_call.1} parent=5 // pred_check
        %p271 = pneg %p270
      $region38: #{tpu_custom_call.1} parent=5 // pred_check_branch
        %273 = sbr.rel (%p271) target = $region40
      $region39: #{tpu_custom_call.1} parent=5 // pred_region
        // Predicated region
        $region41: #{tpu_custom_call.1} parent=39 // pred_check
          %p274 = pneg %p51
        $region42: #{tpu_custom_call.1} parent=39 // pred_check_branch
          %276 = sbr.rel (%p274) target = $region44
        $region43: #{tpu_custom_call.1} parent=39 // pred_region
          %s277 = smul.u32 2, %s25
          %p278 = scmp.lt.s32.totalorder %s24, 1
          %s279 = scalar_select %p278, %s24, 1
          %p280 = scmp.lt.s32.totalorder %s277, 1
          %s281 = scalar_select %p280, %s277, 1
          %s282 = smul.addr %s279, 2
          %s283 = sadd.s32 %s281, %s282
          %s284 = smul.addr %s283, 8
          %s285 = scalar_lea.vmem %s0, %s284
          %s286 = smul.u32 2, %s25
        $region44: #{tpu_custom_call.1} parent=39 // pred_fallthru
          _
        // Predicated region
        $region45: #{tpu_custom_call.1} parent=39 // pred_check
          %p287 = pneg %p77
        $region46: #{tpu_custom_call.1} parent=39 // pred_check_branch
          %289 = sbr.rel (%p287) target = $region48
        $region47: #{tpu_custom_call.1} parent=39 // pred_region
          %p290 = scmp.lt.s32.totalorder %s24, 1
          %s291 = scalar_select %p290, %s24, 1
          %s292 = smul.addr %s291, 8
          %s293 = scalar_lea.vmem %s1, %s292
        $region48: #{tpu_custom_call.1} parent=39 // pred_fallthru
          _
      $region40: #{tpu_custom_call.1} parent=5 // pred_fallthru
        _
      %p294 = scmp.le.s32.totalorder 1, %s17
      %p295 = scmp.lt.s32.totalorder %s17, 3
      %p296 = pnand %p294, %p295
      %p297 = pneg %p296
      // Predicated region
      $region49: #{tpu_custom_call.1} parent=5 // pred_check
        _
      $region50: #{tpu_custom_call.1} parent=5 // pred_check_branch
        %299 = sbr.rel (%p296) target = $region52
      $region51: #{tpu_custom_call.1} parent=5 // pred_region
        %s300 = ssub.s32 %s17, 1
        %s301 = smul.u32 2, %s27
        %p302 = scmp.lt.s32.totalorder %s26, 1
        %s303 = scalar_select %p302, %s26, 1
        %p304 = scmp.lt.s32.totalorder %s301, 1
        %s305 = scalar_select %p304, %s301, 1
        %s306 = smul.addr %s303, 2
        %s307 = sadd.s32 %s305, %s306
        %s308 = smul.addr %s307, 8
        %s309 = scalar_lea.vmem %s0, %s308
        %p310 = pneg %p57
        %p311 = pneg %p54
        %p312 = scmp.lt.s32.totalorder %s26, 1
        %s313 = scalar_select %p312, %s26, 1
        %s314 = smul.addr %s313, 8
        %s315 = scalar_lea.vmem %s1, %s314
        %p316 = pneg %p83
        %p317 = pneg %p80
        %p318 = pneg %p104
        %p319 = pneg %p101
        %p320 = pneg %p125
        %p321 = pneg %p122
        %p322 = pneg %p146
        %p323 = pneg %p143
        %p324 = pneg %p167
        %p325 = pneg %p164
        %p326 = pneg %p188
        %p327 = pneg %p185
        %p328 = pneg %p209
        %p329 = pneg %p206
        %p330 = pneg %p237
        %p331 = pneg %p234
        %s332 = sand.u32 %s224, 1
        %s333 = scalar_lea.sflag [#allocation3], %s332
        %s334 = sand.u32 %s224, 1
        %s335 = smul.addr %s334, 16
        %s336 = scalar_lea.vmem [#allocation2], %s335
        %s337 = smul.u32 2, %s27
        %p338 = scmp.lt.s32.totalorder %s26, 1
        %s339 = scalar_select %p338, %s26, 1
        %p340 = scmp.lt.s32.totalorder %s337, 1
        %s341 = scalar_select %p340, %s337, 1
        %s342 = smul.addr %s339, 2
        %s343 = sadd.s32 %s341, %s342
        %s344 = smul.addr %s343, 8
        %s345 = scalar_lea.vmem %s0, %s344
        %s346 = smul.u32 2, %s27
        %p347 = scmp.lt.s32.totalorder %s26, 1
        %s348 = scalar_select %p347, %s26, 1
        %s349 = smul.addr %s348, 8
        %s350 = scalar_lea.vmem %s1, %s349
        %s351 = smul.u32 2, %s27
        %v352 = vld [vmem:[%s345] sm:$0x7f]
        %v353 = vld [vmem:[%s345 + $0x8] sm:$0x7f]
        %v354 = vld [vmem:[%s350] sm:$0x7f]
        %356 = vrot.lane.b32.xlu0 %v354, 16
        %v357 = vpop.permute.xlu0 %356
        %vm359 = vcmask 130048
        %v360 = vsel %vm359, %v354, %v357
        %362 = vrot.lane.b32.xlu0 %v360, 32
        %v363 = vpop.permute.xlu0 %362
        %vm365 = vcmask 261120
        %v366 = vsel %vm365, %v360, %v363
        %368 = vrot.lane.b32.xlu0 %v366, 64
        %v369 = vpop.permute.xlu0 %368
        %vm371 = vcmask 523264
        %v372 = vsel %vm371, %v366, %v369
        %v373 = vsub.f32 %v352, %v372
        %v374 = vsub.f32 %v353, %v372
        %v375 = vadd.f32 %v373, 3.1415927
        %v376 = vadd.f32 %v374, 3.1415927
        %v377 = vrcp.pop 6.2831855
        %v378 = vmul.f32 %v375, %v377
        %v379 = vmul.f32 %v376, %v377
        %v380 = vfloor.f32 %v378
        %v381 = vfloor.f32 %v379
        %v382 = vmul.f32 %v380, 6.2831855
        %v383 = vmul.f32 %v381, 6.2831855
        %v384 = vsub.f32 %v375, %v382
        %v385 = vsub.f32 %v376, %v383
        %v386 = vsub.f32 %v384, 3.1415927
        %v387 = vsub.f32 %v385, 3.1415927
        %v388 = vmul.f32 %v373, %v373
        %v389 = vmul.f32 %v374, %v374
        %v390 = vmul.f32 %v386, %v386
        %v391 = vmul.f32 %v387, %v387
        %v394 = vrot.slane %v390, 1
        %v395 = vrot.slane %v391, 1
        %v398 = vadd.f32 %v388, %v394
        %v399 = vadd.f32 %v389, %v395
        %v400 = vrsqrt.pop %v398
        %v401 = vmul.f32 %v398, %v400
        %vm402 = vcmp.eq.f32.partialorder %v398, inf
        %v403 = vsel %vm402, %v398, %v401
        %vm404 = vcmp.eq.f32.partialorder %v398, 0.0
        %v405 = vand.u32 %v398, 2147483648
        %v406 = vsel %vm404, %v405, %v403
        %v407 = vrsqrt.pop %v399
        %v408 = vmul.f32 %v399, %v407
        %vm409 = vcmp.eq.f32.partialorder %v399, inf
        %v410 = vsel %vm409, %v399, %v408
        %vm411 = vcmp.eq.f32.partialorder %v399, 0.0
        %v412 = vand.u32 %v399, 2147483648
        %v413 = vsel %vm411, %v412, %v410
        %v414 = vmax.f32 %v406, 1e-08
        %v415 = vmax.f32 %v413, 1e-08
        %v416 = vlog2.pop %v414
        %v417 = vmul.f32 %v416, 0.6931472
        %v418 = vlog2.pop %v415
        %v419 = vmul.f32 %v418, 0.6931472
        %v420 = vmin.f32 %v352, %v372
        %v421 = vmin.f32 %v353, %v372
        %v424 = vrot.slane %v406, 1
        %v425 = vrot.slane %v413, 1
        %v428 = vmul.f32 %v420, %v424
        %v429 = vmul.f32 %v421, %v425
        %v430 = vmax.f32 %v428, 1e-08
        %v431 = vmax.f32 %v429, 1e-08
        %v432 = vlog2.pop %v430
        %v433 = vmul.f32 %v432, 0.6931472
        %v434 = vlog2.pop %v431
        %v435 = vmul.f32 %v434, 0.6931472
        %v436 = vadd.f32 %v352, %v372
        %v437 = vadd.f32 %v353, %v372
        %v438 = vmax.f32 %v436, 1e-08
        %v439 = vmax.f32 %v437, 1e-08
        %v440 = vrcp.pop %v438
        %v441 = vmul.f32 %v420, %v440
        %v442 = vrcp.pop %v439
        %v443 = vmul.f32 %v421, %v442
        %v444 = vmax.f32 %v441, 1e-08
        %v445 = vmax.f32 %v443, 1e-08
        %v446 = vlog2.pop %v444
        %v447 = vmul.f32 %v446, 0.6931472
        %v448 = vlog2.pop %v445
        %v449 = vmul.f32 %v448, 0.6931472
        %v450 = vmul.f32 %v436, %v436
        %v451 = vmul.f32 %v437, %v437
        %v454 = vrot.slane %v450, 1
        %v455 = vrot.slane %v451, 1
        %v458 = vadd.f32 %v450, %v454
        %v459 = vadd.f32 %v451, %v455
        %v460 = vrot.slane %v450, 2
        %v461 = vrot.slane %v451, 2
        %v464 = vadd.f32 %v458, %v460
        %v465 = vadd.f32 %v459, %v461
        %v468 = vrot.slane %v464, 5
        %v469 = vrot.slane %v465, 5
        %v472 = vsub.f32 %v450, %v468
        %v473 = vsub.f32 %v451, %v469
        %v474 = vmax.f32 %v472, 1e-08
        %v475 = vmax.f32 %v473, 1e-08
        %v476 = vlog2.pop %v474
        %v477 = vmul.f32 %v476, 0.6931472
        %v478 = vlog2.pop %v475
        %v479 = vmul.f32 %v478, 0.6931472
        %v482 = vrot.slane %v447, 7
        %v483 = vrot.slane %v449, 7
        %v488 = vrot.slane %v417, 7
        %v489 = vrot.slane %v419, 7
        %v494 = vrot.slane %v477, 3
        %v495 = vrot.slane %v479, 3
        %vm498 = vcmask 1040384
        %v499 = vsel %vm498, %v433, %v482
        %v500 = vsel %vm498, %v435, %v483
        %vm501 = vcmask 1041408
        %v502 = vsel %vm501, %v499, %v488
        %v503 = vsel %vm501, %v500, %v489
        %vm504 = vcmask 1042432
        %v505 = vsel %vm504, %v502, %v494
        %v506 = vsel %vm504, %v503, %v495
        %v507 = vld [vmem:[%s2] sm:$0xff]
        %v508 = vld [vmem:[%s2 + $0x8] sm:$0xff]
        %v509 = vld [vmem:[%s2 + $0x10] sm:$0xff]
        %v510 = vld [vmem:[%s2 + $0x18] sm:$0xff]
        %v511 = vld [vmem:[%s3] sm:$0xff]
        %v512 = vld [vmem:[%s3 + $0x8] sm:$0xff]
        %v513 = vld [vmem:[%s3 + $0x10] sm:$0xff]
        %v514 = vld [vmem:[%s3 + $0x18] sm:$0xff]
        %516 = vset.pattern.permute.xlu0 0
        %517 = vperm.xlu0 %516, %v511
        %v518 = vpop.permute.xlu0 %517
        %521 = vset.pattern.permute.xlu0 0
        %522 = vperm.xlu0 %521, %v512
        %v523 = vpop.permute.xlu0 %522
        %526 = vset.pattern.permute.xlu0 0
        %527 = vperm.xlu0 %526, %v513
        %v528 = vpop.permute.xlu0 %527
        %531 = vset.pattern.permute.xlu0 0
        %532 = vperm.xlu0 %531, %v514
        %v533 = vpop.permute.xlu0 %532
        %vm535 = vcmask 31744
        %v537 = vsel %vm535, %v507, 0
        %v540 = vsel %vm535, %v508, 0
        %v543 = vsel %vm535, %v509, 0
        %v546 = vsel %vm535, %v510, 0
        %vm548 = vcmask 1043456
        %v550 = vsel %vm548, %v505, 0
        %v553 = vsel %vm548, %v506, 0
        %v555 = vand.u32 %v553, 4294901760
        %556 = vmatprep.subr.mxu0 %v555
        %v557 = vand.u32 %v550, 4294901760
        %558 = vmatpush1.msra.mxu0 %v557
        %559 = vmatprep.subr.mxu0 0.0
        %560 = vmatpush1.msra.mxu0 0.0
        %561 = vmatprep.subr.mxu0 0.0
        %562 = vmatpush1.msra.mxu0 0.0
        %563 = vmatprep.subr.mxu0 0.0
        %564 = vmatpush1.msra.mxu0 0.0
        %565 = vmatprep.subr.mxu0 0.0
        %566 = vmatpush1.msra.mxu0 0.0
        %567 = vmatprep.subr.mxu0 0.0
        %568 = vmatpush1.msra.mxu0 0.0
        %569 = vmatprep.subr.mxu0 0.0
        %570 = vmatpush1.msra.mxu0 0.0
        %571 = vmatprep.subr.mxu0 0.0
        %572 = vmatpush1.msra.mxu0 0.0
        %573 = vmatprep.subr.mxu0 0.0
        %574 = vmatpush1.msra.mxu0 0.0
        %575 = vmatprep.subr.mxu0 0.0
        %576 = vmatpush1.msra.mxu0 0.0
        %577 = vmatprep.subr.mxu0 0.0
        %578 = vmatpush1.msra.mxu0 0.0
        %579 = vmatprep.subr.mxu0 0.0
        %580 = vmatpush1.msra.mxu0 0.0
        %581 = vmatprep.subr.mxu0 0.0
        %582 = vmatpush1.msra.mxu0 0.0
        %583 = vmatprep.subr.mxu0 0.0
        %584 = vmatpush1.msra.mxu0 0.0
        %585 = vmatprep.subr.mxu0 0.0
        %586 = vmatpush1.msra.mxu0 0.0
        %587 = vmatprep.subr.mxu0 0.0
        %588 = vmatpush1.msra.mxu0 0.0
        %589 = vmatprep.subr.mxu0 0.0
        %590 = vmatpush1.msra.mxu0 0.0
        %591 = vmatprep.subr.mxu0 0.0
        %592 = vmatpush1.msra.mxu0 0.0
        %593 = vmatprep.subr.mxu0 0.0
        %594 = vmatpush1.msra.mxu0 0.0
        %595 = vmatprep.subr.mxu0 0.0
        %596 = vmatpush1.msra.mxu0 0.0
        %597 = vmatprep.subr.mxu0 0.0
        %598 = vmatpush1.msra.mxu0 0.0
        %599 = vmatprep.subr.mxu0 0.0
        %600 = vmatpush1.msra.mxu0 0.0
        %601 = vmatprep.subr.mxu0 0.0
        %602 = vmatpush1.msra.mxu0 0.0
        %603 = vmatprep.subr.mxu0 0.0
        %604 = vmatpush1.msra.mxu0 0.0
        %605 = vmatprep.subr.mxu0 0.0
        %606 = vmatpush1.msra.mxu0 0.0
        %607 = vmatprep.subr.mxu0 0.0
        %608 = vmatpush1.msra.mxu0 0.0
        %609 = vmatprep.subr.mxu0 0.0
        %610 = vmatpush1.msra.mxu0 0.0
        %611 = vmatprep.subr.mxu0 0.0
        %612 = vmatpush1.msra.mxu0 0.0
        %613 = vmatprep.subr.mxu0 0.0
        %614 = vmatpush1.msra.mxu0 0.0
        %615 = vmatprep.subr.mxu0 0.0
        %616 = vmatpush1.msra.mxu0 0.0
        %617 = vmatprep.subr.mxu0 0.0
        %618 = vmatpush1.msra.mxu0 0.0
        %619 = vmatprep.subr.mxu0 0.0
        %620 = vmatpush1.msra.mxu0 0.0
        %621 = vmatprep.mubr.f32.mxu0 0.0
        %v622 = vand.u32 %v537, 4294901760
        %v623 = vsub.f32 %v537, %v622
        %v624 = vand.u32 %v623, 4294901760
        %v625 = vsub.f32 %v623, %v624
        %v626 = vand.u32 %v625, 4294901760
        %627 = vmatmul.mubr.f32.gmra.mrb[0].mxu0 %v626
        %v628 = vpop.f32.mrb[0].mxu0
        %v629 = vadd.f32 %v518, %v628
        %v630 = vpop.f32.mrb[0].mxu0
        %v631 = vadd.f32 %v518, %v630
        %632 = vmatprep.mubr.f32.mxu0 0.0
        %v633 = vand.u32 %v540, 4294901760
        %v634 = vsub.f32 %v540, %v633
        %v635 = vand.u32 %v634, 4294901760
        %v636 = vsub.f32 %v634, %v635
        %v637 = vand.u32 %v636, 4294901760
        %638 = vmatmul.mubr.f32.gmra.mrb[0].mxu0 %v637
        %v639 = vpop.f32.mrb[0].mxu0
        %v640 = vadd.f32 %v523, %v639
        %v641 = vpop.f32.mrb[0].mxu0
        %v642 = vadd.f32 %v523, %v641
        %643 = vmatprep.mubr.f32.mxu0 0.0
        %v644 = vand.u32 %v543, 4294901760
        %v645 = vsub.f32 %v543, %v644
        %v646 = vand.u32 %v645, 4294901760
        %v647 = vsub.f32 %v645, %v646
        %v648 = vand.u32 %v647, 4294901760
        %649 = vmatmul.mubr.f32.gmra.mrb[0].mxu0 %v648
        %v650 = vpop.f32.mrb[0].mxu0
        %v651 = vadd.f32 %v528, %v650
        %v652 = vpop.f32.mrb[0].mxu0
        %v653 = vadd.f32 %v528, %v652
        %654 = vmatprep.mubr.f32.mxu0 0.0
        %v655 = vand.u32 %v546, 4294901760
        %v656 = vsub.f32 %v546, %v655
        %v657 = vand.u32 %v656, 4294901760
        %v658 = vsub.f32 %v656, %v657
        %v659 = vand.u32 %v658, 4294901760
        %660 = vmatmul.mubr.f32.gmra.mrb[0].mxu0 %v659
        %v661 = vpop.f32.mrb[0].mxu0
        %v662 = vadd.f32 %v533, %v661
        %v663 = vpop.f32.mrb[0].mxu0
        %v664 = vadd.f32 %v533, %v663
        %665 = vdwg.mxu0
        %v666 = vand.u32 %v553, 4294901760
        %v667 = vsub.f32 %v553, %v666
        %v668 = vand.u32 %v667, 4294901760
        %v669 = vsub.f32 %v667, %v668
        %v670 = vand.u32 %v669, 4294901760
        %671 = vmatprep.subr.mxu0 %v670
        %v672 = vand.u32 %v550, 4294901760
        %v673 = vsub.f32 %v550, %v672
        %v674 = vand.u32 %v673, 4294901760
        %v675 = vsub.f32 %v673, %v674
        %v676 = vand.u32 %v675, 4294901760
        %677 = vmatpush1.msra.mxu0 %v676
        %678 = vmatprep.subr.mxu0 0.0
        %679 = vmatpush1.msra.mxu0 0.0
        %680 = vmatprep.subr.mxu0 0.0
        %681 = vmatpush1.msra.mxu0 0.0
        %682 = vmatprep.subr.mxu0 0.0
        %683 = vmatpush1.msra.mxu0 0.0
        %684 = vmatprep.subr.mxu0 0.0
        %685 = vmatpush1.msra.mxu0 0.0
        %686 = vmatprep.subr.mxu0 0.0
        %687 = vmatpush1.msra.mxu0 0.0
        %688 = vmatprep.subr.mxu0 0.0
        %689 = vmatpush1.msra.mxu0 0.0
        %690 = vmatprep.subr.mxu0 0.0
        %691 = vmatpush1.msra.mxu0 0.0
        %692 = vmatprep.subr.mxu0 0.0
        %693 = vmatpush1.msra.mxu0 0.0
        %694 = vmatprep.subr.mxu0 0.0
        %695 = vmatpush1.msra.mxu0 0.0
        %696 = vmatprep.subr.mxu0 0.0
        %697 = vmatpush1.msra.mxu0 0.0
        %698 = vmatprep.subr.mxu0 0.0
        %699 = vmatpush1.msra.mxu0 0.0
        %700 = vmatprep.subr.mxu0 0.0
        %701 = vmatpush1.msra.mxu0 0.0
        %702 = vmatprep.subr.mxu0 0.0
        %703 = vmatpush1.msra.mxu0 0.0
        %704 = vmatprep.subr.mxu0 0.0
        %705 = vmatpush1.msra.mxu0 0.0
        %706 = vmatprep.subr.mxu0 0.0
        %707 = vmatpush1.msra.mxu0 0.0
        %708 = vmatprep.subr.mxu0 0.0
        %709 = vmatpush1.msra.mxu0 0.0
        %710 = vmatprep.subr.mxu0 0.0
        %711 = vmatpush1.msra.mxu0 0.0
        %712 = vmatprep.subr.mxu0 0.0
        %713 = vmatpush1.msra.mxu0 0.0
        %714 = vmatprep.subr.mxu0 0.0
        %715 = vmatpush1.msra.mxu0 0.0
        %716 = vmatprep.subr.mxu0 0.0
        %717 = vmatpush1.msra.mxu0 0.0
        %718 = vmatprep.subr.mxu0 0.0
        %719 = vmatpush1.msra.mxu0 0.0
        %720 = vmatprep.subr.mxu0 0.0
        %721 = vmatpush1.msra.mxu0 0.0
        %722 = vmatprep.subr.mxu0 0.0
        %723 = vmatpush1.msra.mxu0 0.0
        %724 = vmatprep.subr.mxu0 0.0
        %725 = vmatpush1.msra.mxu0 0.0
        %726 = vmatprep.subr.mxu0 0.0
        %727 = vmatpush1.msra.mxu0 0.0
        %728 = vmatprep.subr.mxu0 0.0
        %729 = vmatpush1.msra.mxu0 0.0
        %730 = vmatprep.subr.mxu0 0.0
        %731 = vmatpush1.msra.mxu0 0.0
        %732 = vmatprep.subr.mxu0 0.0
        %733 = vmatpush1.msra.mxu0 0.0
        %734 = vmatprep.subr.mxu0 0.0
        %735 = vmatpush1.msra.mxu0 0.0
        %736 = vmatprep.subr.mxu0 0.0
        %737 = vmatpush1.msra.mxu0 0.0
        %738 = vmatprep.subr.mxu0 0.0
        %739 = vmatpush1.msra.mxu0 0.0
        %740 = vmatprep.mubr.f32.mxu0 0.0
        %v741 = vand.u32 %v537, 4294901760
        %742 = vmatmul.mubr.f32.gmra.mrb[0].mxu0 %v741
        %v743 = vpop.f32.mrb[0].mxu0
        %v744 = vadd.f32 %v629, %v743
        %v745 = vpop.f32.mrb[0].mxu0
        %v746 = vadd.f32 %v631, %v745
        %747 = vmatprep.mubr.f32.mxu0 0.0
        %v748 = vand.u32 %v540, 4294901760
        %749 = vmatmul.mubr.f32.gmra.mrb[0].mxu0 %v748
        %v750 = vpop.f32.mrb[0].mxu0
        %v751 = vadd.f32 %v640, %v750
        %v752 = vpop.f32.mrb[0].mxu0
        %v753 = vadd.f32 %v642, %v752
        %754 = vmatprep.mubr.f32.mxu0 0.0
        %v755 = vand.u32 %v543, 4294901760
        %756 = vmatmul.mubr.f32.gmra.mrb[0].mxu0 %v755
        %v757 = vpop.f32.mrb[0].mxu0
        %v758 = vadd.f32 %v651, %v757
        %v759 = vpop.f32.mrb[0].mxu0
        %v760 = vadd.f32 %v653, %v759
        %761 = vmatprep.mubr.f32.mxu0 0.0
        %v762 = vand.u32 %v546, 4294901760
        %763 = vmatmul.mubr.f32.gmra.mrb[0].mxu0 %v762
        %v764 = vpop.f32.mrb[0].mxu0
        %v765 = vadd.f32 %v662, %v764
        %v766 = vpop.f32.mrb[0].mxu0
        %v767 = vadd.f32 %v664, %v766
        %768 = vdwg.mxu0
        %v769 = vand.u32 %v553, 4294901760
        %v770 = vsub.f32 %v553, %v769
        %771 = vmatprep.subr.mxu0 %v770
        %v772 = vand.u32 %v550, 4294901760
        %v773 = vsub.f32 %v550, %v772
        %774 = vmatpush1.msra.mxu0 %v773
        %775 = vmatprep.subr.mxu0 0.0
        %776 = vmatpush1.msra.mxu0 0.0
        %777 = vmatprep.subr.mxu0 0.0
        %778 = vmatpush1.msra.mxu0 0.0
        %779 = vmatprep.subr.mxu0 0.0
        %780 = vmatpush1.msra.mxu0 0.0
        %781 = vmatprep.subr.mxu0 0.0
        %782 = vmatpush1.msra.mxu0 0.0
        %783 = vmatprep.subr.mxu0 0.0
        %784 = vmatpush1.msra.mxu0 0.0
        %785 = vmatprep.subr.mxu0 0.0
        %786 = vmatpush1.msra.mxu0 0.0
        %787 = vmatprep.subr.mxu0 0.0
        %788 = vmatpush1.msra.mxu0 0.0
        %789 = vmatprep.subr.mxu0 0.0
        %790 = vmatpush1.msra.mxu0 0.0
        %791 = vmatprep.subr.mxu0 0.0
        %792 = vmatpush1.msra.mxu0 0.0
        %793 = vmatprep.subr.mxu0 0.0
        %794 = vmatpush1.msra.mxu0 0.0
        %795 = vmatprep.subr.mxu0 0.0
        %796 = vmatpush1.msra.mxu0 0.0
        %797 = vmatprep.subr.mxu0 0.0
        %798 = vmatpush1.msra.mxu0 0.0
        %799 = vmatprep.subr.mxu0 0.0
        %800 = vmatpush1.msra.mxu0 0.0
        %801 = vmatprep.subr.mxu0 0.0
        %802 = vmatpush1.msra.mxu0 0.0
        %803 = vmatprep.subr.mxu0 0.0
        %804 = vmatpush1.msra.mxu0 0.0
        %805 = vmatprep.subr.mxu0 0.0
        %806 = vmatpush1.msra.mxu0 0.0
        %807 = vmatprep.subr.mxu0 0.0
        %808 = vmatpush1.msra.mxu0 0.0
        %809 = vmatprep.subr.mxu0 0.0
        %810 = vmatpush1.msra.mxu0 0.0
        %811 = vmatprep.subr.mxu0 0.0
        %812 = vmatpush1.msra.mxu0 0.0
        %813 = vmatprep.subr.mxu0 0.0
        %814 = vmatpush1.msra.mxu0 0.0
        %815 = vmatprep.subr.mxu0 0.0
        %816 = vmatpush1.msra.mxu0 0.0
        %817 = vmatprep.subr.mxu0 0.0
        %818 = vmatpush1.msra.mxu0 0.0
        %819 = vmatprep.subr.mxu0 0.0
        %820 = vmatpush1.msra.mxu0 0.0
        %821 = vmatprep.subr.mxu0 0.0
        %822 = vmatpush1.msra.mxu0 0.0
        %823 = vmatprep.subr.mxu0 0.0
        %824 = vmatpush1.msra.mxu0 0.0
        %825 = vmatprep.subr.mxu0 0.0
        %826 = vmatpush1.msra.mxu0 0.0
        %827 = vmatprep.subr.mxu0 0.0
        %828 = vmatpush1.msra.mxu0 0.0
        %829 = vmatprep.subr.mxu0 0.0
        %830 = vmatpush1.msra.mxu0 0.0
        %831 = vmatprep.subr.mxu0 0.0
        %832 = vmatpush1.msra.mxu0 0.0
        %833 = vmatprep.subr.mxu0 0.0
        %834 = vmatpush1.msra.mxu0 0.0
        %835 = vmatprep.subr.mxu0 0.0
        %836 = vmatpush1.msra.mxu0 0.0
        %837 = vmatprep.mubr.f32.mxu0 0.0
        %v838 = vand.u32 %v537, 4294901760
        %v839 = vsub.f32 %v537, %v838
        %840 = vmatmul.mubr.f32.gmra.mrb[0].mxu0 %v839
        %v841 = vpop.f32.mrb[0].mxu0
        %v842 = vadd.f32 %v744, %v841
        %v843 = vpop.f32.mrb[0].mxu0
        %v844 = vadd.f32 %v746, %v843
        %845 = vmatprep.mubr.f32.mxu0 0.0
        %v846 = vand.u32 %v540, 4294901760
        %v847 = vsub.f32 %v540, %v846
        %848 = vmatmul.mubr.f32.gmra.mrb[0].mxu0 %v847
        %v849 = vpop.f32.mrb[0].mxu0
        %v850 = vadd.f32 %v751, %v849
        %v851 = vpop.f32.mrb[0].mxu0
        %v852 = vadd.f32 %v753, %v851
        %853 = vmatprep.mubr.f32.mxu0 0.0
        %v854 = vand.u32 %v543, 4294901760
        %v855 = vsub.f32 %v543, %v854
        %856 = vmatmul.mubr.f32.gmra.mrb[0].mxu0 %v855
        %v857 = vpop.f32.mrb[0].mxu0
        %v858 = vadd.f32 %v758, %v857
        %v859 = vpop.f32.mrb[0].mxu0
        %v860 = vadd.f32 %v760, %v859
        %861 = vmatprep.mubr.f32.mxu0 0.0
        %v862 = vand.u32 %v546, 4294901760
        %v863 = vsub.f32 %v546, %v862
        %864 = vmatmul.mubr.f32.gmra.mrb[0].mxu0 %v863
        %v865 = vpop.f32.mrb[0].mxu0
        %v866 = vadd.f32 %v765, %v865
        %v867 = vpop.f32.mrb[0].mxu0
        %v868 = vadd.f32 %v767, %v867
        %869 = vdwg.mxu0
        %v870 = vand.u32 %v553, 4294901760
        %871 = vmatprep.subr.mxu0 %v870
        %v872 = vand.u32 %v550, 4294901760
        %873 = vmatpush1.msra.mxu0 %v872
        %874 = vmatprep.subr.mxu0 0.0
        %875 = vmatpush1.msra.mxu0 0.0
        %876 = vmatprep.subr.mxu0 0.0
        %877 = vmatpush1.msra.mxu0 0.0
        %878 = vmatprep.subr.mxu0 0.0
        %879 = vmatpush1.msra.mxu0 0.0
        %880 = vmatprep.subr.mxu0 0.0
        %881 = vmatpush1.msra.mxu0 0.0
        %882 = vmatprep.subr.mxu0 0.0
        %883 = vmatpush1.msra.mxu0 0.0
        %884 = vmatprep.subr.mxu0 0.0
        %885 = vmatpush1.msra.mxu0 0.0
        %886 = vmatprep.subr.mxu0 0.0
        %887 = vmatpush1.msra.mxu0 0.0
        %888 = vmatprep.subr.mxu0 0.0
        %889 = vmatpush1.msra.mxu0 0.0
        %890 = vmatprep.subr.mxu0 0.0
        %891 = vmatpush1.msra.mxu0 0.0
        %892 = vmatprep.subr.mxu0 0.0
        %893 = vmatpush1.msra.mxu0 0.0
        %894 = vmatprep.subr.mxu0 0.0
        %895 = vmatpush1.msra.mxu0 0.0
        %896 = vmatprep.subr.mxu0 0.0
        %897 = vmatpush1.msra.mxu0 0.0
        %898 = vmatprep.subr.mxu0 0.0
        %899 = vmatpush1.msra.mxu0 0.0
        %900 = vmatprep.subr.mxu0 0.0
        %901 = vmatpush1.msra.mxu0 0.0
        %902 = vmatprep.subr.mxu0 0.0
        %903 = vmatpush1.msra.mxu0 0.0
        %904 = vmatprep.subr.mxu0 0.0
        %905 = vmatpush1.msra.mxu0 0.0
        %906 = vmatprep.subr.mxu0 0.0
        %907 = vmatpush1.msra.mxu0 0.0
        %908 = vmatprep.subr.mxu0 0.0
        %909 = vmatpush1.msra.mxu0 0.0
        %910 = vmatprep.subr.mxu0 0.0
        %911 = vmatpush1.msra.mxu0 0.0
        %912 = vmatprep.subr.mxu0 0.0
        %913 = vmatpush1.msra.mxu0 0.0
        %914 = vmatprep.subr.mxu0 0.0
        %915 = vmatpush1.msra.mxu0 0.0
        %916 = vmatprep.subr.mxu0 0.0
        %917 = vmatpush1.msra.mxu0 0.0
        %918 = vmatprep.subr.mxu0 0.0
        %919 = vmatpush1.msra.mxu0 0.0
        %920 = vmatprep.subr.mxu0 0.0
        %921 = vmatpush1.msra.mxu0 0.0
        %922 = vmatprep.subr.mxu0 0.0
        %923 = vmatpush1.msra.mxu0 0.0
        %924 = vmatprep.subr.mxu0 0.0
        %925 = vmatpush1.msra.mxu0 0.0
        %926 = vmatprep.subr.mxu0 0.0
        %927 = vmatpush1.msra.mxu0 0.0
        %928 = vmatprep.subr.mxu0 0.0
        %929 = vmatpush1.msra.mxu0 0.0
        %930 = vmatprep.subr.mxu0 0.0
        %931 = vmatpush1.msra.mxu0 0.0
        %932 = vmatprep.subr.mxu0 0.0
        %933 = vmatpush1.msra.mxu0 0.0
        %934 = vmatprep.subr.mxu0 0.0
        %935 = vmatpush1.msra.mxu0 0.0
        %936 = vmatprep.mubr.f32.mxu0 0.0
        %v937 = vand.u32 %v537, 4294901760
        %v938 = vsub.f32 %v537, %v937
        %v939 = vand.u32 %v938, 4294901760
        %940 = vmatmul.mubr.f32.gmra.mrb[0].mxu0 %v939
        %v941 = vpop.f32.mrb[0].mxu0
        %v942 = vadd.f32 %v842, %v941
        %v943 = vpop.f32.mrb[0].mxu0
        %v944 = vadd.f32 %v844, %v943
        %945 = vmatprep.mubr.f32.mxu0 0.0
        %v946 = vand.u32 %v540, 4294901760
        %v947 = vsub.f32 %v540, %v946
        %v948 = vand.u32 %v947, 4294901760
        %949 = vmatmul.mubr.f32.gmra.mrb[0].mxu0 %v948
        %v950 = vpop.f32.mrb[0].mxu0
        %v951 = vadd.f32 %v850, %v950
        %v952 = vpop.f32.mrb[0].mxu0
        %v953 = vadd.f32 %v852, %v952
        %954 = vmatprep.mubr.f32.mxu0 0.0
        %v955 = vand.u32 %v543, 4294901760
        %v956 = vsub.f32 %v543, %v955
        %v957 = vand.u32 %v956, 4294901760
        %958 = vmatmul.mubr.f32.gmra.mrb[0].mxu0 %v957
        %v959 = vpop.f32.mrb[0].mxu0
        %v960 = vadd.f32 %v858, %v959
        %v961 = vpop.f32.mrb[0].mxu0
        %v962 = vadd.f32 %v860, %v961
        %963 = vmatprep.mubr.f32.mxu0 0.0
        %v964 = vand.u32 %v546, 4294901760
        %v965 = vsub.f32 %v546, %v964
        %v966 = vand.u32 %v965, 4294901760
        %967 = vmatmul.mubr.f32.gmra.mrb[0].mxu0 %v966
        %v968 = vpop.f32.mrb[0].mxu0
        %v969 = vadd.f32 %v866, %v968
        %v970 = vpop.f32.mrb[0].mxu0
        %v971 = vadd.f32 %v868, %v970
        %972 = vdwg.mxu0
        %v973 = vand.u32 %v553, 4294901760
        %v974 = vsub.f32 %v553, %v973
        %v975 = vand.u32 %v974, 4294901760
        %976 = vmatprep.subr.mxu0 %v975
        %v977 = vand.u32 %v550, 4294901760
        %v978 = vsub.f32 %v550, %v977
        %v979 = vand.u32 %v978, 4294901760
        %980 = vmatpush1.msra.mxu0 %v979
        %981 = vmatprep.subr.mxu0 0.0
        %982 = vmatpush1.msra.mxu0 0.0
        %983 = vmatprep.subr.mxu0 0.0
        %984 = vmatpush1.msra.mxu0 0.0
        %985 = vmatprep.subr.mxu0 0.0
        %986 = vmatpush1.msra.mxu0 0.0
        %987 = vmatprep.subr.mxu0 0.0
        %988 = vmatpush1.msra.mxu0 0.0
        %989 = vmatprep.subr.mxu0 0.0
        %990 = vmatpush1.msra.mxu0 0.0
        %991 = vmatprep.subr.mxu0 0.0
        %992 = vmatpush1.msra.mxu0 0.0
        %993 = vmatprep.subr.mxu0 0.0
        %994 = vmatpush1.msra.mxu0 0.0
        %995 = vmatprep.subr.mxu0 0.0
        %996 = vmatpush1.msra.mxu0 0.0
        %997 = vmatprep.subr.mxu0 0.0
        %998 = vmatpush1.msra.mxu0 0.0
        %999 = vmatprep.subr.mxu0 0.0
        %1000 = vmatpush1.msra.mxu0 0.0
        %1001 = vmatprep.subr.mxu0 0.0
        %1002 = vmatpush1.msra.mxu0 0.0
        %1003 = vmatprep.subr.mxu0 0.0
        %1004 = vmatpush1.msra.mxu0 0.0
        %1005 = vmatprep.subr.mxu0 0.0
        %1006 = vmatpush1.msra.mxu0 0.0
        %1007 = vmatprep.subr.mxu0 0.0
        %1008 = vmatpush1.msra.mxu0 0.0
        %1009 = vmatprep.subr.mxu0 0.0
        %1010 = vmatpush1.msra.mxu0 0.0
        %1011 = vmatprep.subr.mxu0 0.0
        %1012 = vmatpush1.msra.mxu0 0.0
        %1013 = vmatprep.subr.mxu0 0.0
        %1014 = vmatpush1.msra.mxu0 0.0
        %1015 = vmatprep.subr.mxu0 0.0
        %1016 = vmatpush1.msra.mxu0 0.0
        %1017 = vmatprep.subr.mxu0 0.0
        %1018 = vmatpush1.msra.mxu0 0.0
        %1019 = vmatprep.subr.mxu0 0.0
        %1020 = vmatpush1.msra.mxu0 0.0
        %1021 = vmatprep.subr.mxu0 0.0
        %1022 = vmatpush1.msra.mxu0 0.0
        %1023 = vmatprep.subr.mxu0 0.0
        %1024 = vmatpush1.msra.mxu0 0.0
        %1025 = vmatprep.subr.mxu0 0.0
        %1026 = vmatpush1.msra.mxu0 0.0
        %1027 = vmatprep.subr.mxu0 0.0
        %1028 = vmatpush1.msra.mxu0 0.0
        %1029 = vmatprep.subr.mxu0 0.0
        %1030 = vmatpush1.msra.mxu0 0.0
        %1031 = vmatprep.subr.mxu0 0.0
        %1032 = vmatpush1.msra.mxu0 0.0
        %1033 = vmatprep.subr.mxu0 0.0
        %1034 = vmatpush1.msra.mxu0 0.0
        %1035 = vmatprep.subr.mxu0 0.0
        %1036 = vmatpush1.msra.mxu0 0.0
        %1037 = vmatprep.subr.mxu0 0.0
        %1038 = vmatpush1.msra.mxu0 0.0
        %1039 = vmatprep.subr.mxu0 0.0
        %1040 = vmatpush1.msra.mxu0 0.0
        %1041 = vmatprep.subr.mxu0 0.0
        %1042 = vmatpush1.msra.mxu0 0.0
        %1043 = vmatprep.mubr.f32.mxu0 0.0
        %v1044 = vand.u32 %v537, 4294901760
        %1045 = vmatmul.mubr.f32.gmra.mrb[0].mxu0 %v1044
        %v1046 = vpop.f32.mrb[0].mxu0
        %v1047 = vadd.f32 %v942, %v1046
        %v1048 = vpop.f32.mrb[0].mxu0
        %v1049 = vadd.f32 %v944, %v1048
        %1050 = vmatprep.mubr.f32.mxu0 0.0
        %v1051 = vand.u32 %v540, 4294901760
        %1052 = vmatmul.mubr.f32.gmra.mrb[0].mxu0 %v1051
        %v1053 = vpop.f32.mrb[0].mxu0
        %v1054 = vadd.f32 %v951, %v1053
        %v1055 = vpop.f32.mrb[0].mxu0
        %v1056 = vadd.f32 %v953, %v1055
        %1057 = vmatprep.mubr.f32.mxu0 0.0
        %v1058 = vand.u32 %v543, 4294901760
        %1059 = vmatmul.mubr.f32.gmra.mrb[0].mxu0 %v1058
        %v1060 = vpop.f32.mrb[0].mxu0
        %v1061 = vadd.f32 %v960, %v1060
        %v1062 = vpop.f32.mrb[0].mxu0
        %v1063 = vadd.f32 %v962, %v1062
        %1064 = vmatprep.mubr.f32.mxu0 0.0
        %v1065 = vand.u32 %v546, 4294901760
        %1066 = vmatmul.mubr.f32.gmra.mrb[0].mxu0 %v1065
        %v1067 = vpop.f32.mrb[0].mxu0
        %v1068 = vadd.f32 %v969, %v1067
        %v1069 = vpop.f32.mrb[0].mxu0
        %v1070 = vadd.f32 %v971, %v1069
        %1071 = vdwg.mxu0
        %v1072 = vand.u32 %v553, 4294901760
        %1073 = vmatprep.subr.mxu0 %v1072
        %v1074 = vand.u32 %v550, 4294901760
        %1075 = vmatpush1.msra.mxu0 %v1074
        %1076 = vmatprep.subr.mxu0 0.0
        %1077 = vmatpush1.msra.mxu0 0.0
        %1078 = vmatprep.subr.mxu0 0.0
        %1079 = vmatpush1.msra.mxu0 0.0
        %1080 = vmatprep.subr.mxu0 0.0
        %1081 = vmatpush1.msra.mxu0 0.0
        %1082 = vmatprep.subr.mxu0 0.0
        %1083 = vmatpush1.msra.mxu0 0.0
        %1084 = vmatprep.subr.mxu0 0.0
        %1085 = vmatpush1.msra.mxu0 0.0
        %1086 = vmatprep.subr.mxu0 0.0
        %1087 = vmatpush1.msra.mxu0 0.0
        %1088 = vmatprep.subr.mxu0 0.0
        %1089 = vmatpush1.msra.mxu0 0.0
        %1090 = vmatprep.subr.mxu0 0.0
        %1091 = vmatpush1.msra.mxu0 0.0
        %1092 = vmatprep.subr.mxu0 0.0
        %1093 = vmatpush1.msra.mxu0 0.0
        %1094 = vmatprep.subr.mxu0 0.0
        %1095 = vmatpush1.msra.mxu0 0.0
        %1096 = vmatprep.subr.mxu0 0.0
        %1097 = vmatpush1.msra.mxu0 0.0
        %1098 = vmatprep.subr.mxu0 0.0
        %1099 = vmatpush1.msra.mxu0 0.0
        %1100 = vmatprep.subr.mxu0 0.0
        %1101 = vmatpush1.msra.mxu0 0.0
        %1102 = vmatprep.subr.mxu0 0.0
        %1103 = vmatpush1.msra.mxu0 0.0
        %1104 = vmatprep.subr.mxu0 0.0
        %1105 = vmatpush1.msra.mxu0 0.0
        %1106 = vmatprep.subr.mxu0 0.0
        %1107 = vmatpush1.msra.mxu0 0.0
        %1108 = vmatprep.subr.mxu0 0.0
        %1109 = vmatpush1.msra.mxu0 0.0
        %1110 = vmatprep.subr.mxu0 0.0
        %1111 = vmatpush1.msra.mxu0 0.0
        %1112 = vmatprep.subr.mxu0 0.0
        %1113 = vmatpush1.msra.mxu0 0.0
        %1114 = vmatprep.subr.mxu0 0.0
        %1115 = vmatpush1.msra.mxu0 0.0
        %1116 = vmatprep.subr.mxu0 0.0
        %1117 = vmatpush1.msra.mxu0 0.0
        %1118 = vmatprep.subr.mxu0 0.0
        %1119 = vmatpush1.msra.mxu0 0.0
        %1120 = vmatprep.subr.mxu0 0.0
        %1121 = vmatpush1.msra.mxu0 0.0
        %1122 = vmatprep.subr.mxu0 0.0
        %1123 = vmatpush1.msra.mxu0 0.0
        %1124 = vmatprep.subr.mxu0 0.0
        %1125 = vmatpush1.msra.mxu0 0.0
        %1126 = vmatprep.subr.mxu0 0.0
        %1127 = vmatpush1.msra.mxu0 0.0
        %1128 = vmatprep.subr.mxu0 0.0
        %1129 = vmatpush1.msra.mxu0 0.0
        %1130 = vmatprep.subr.mxu0 0.0
        %1131 = vmatpush1.msra.mxu0 0.0
        %1132 = vmatprep.subr.mxu0 0.0
        %1133 = vmatpush1.msra.mxu0 0.0
        %1134 = vmatprep.subr.mxu0 0.0
        %1135 = vmatpush1.msra.mxu0 0.0
        %1136 = vmatprep.subr.mxu0 0.0
        %1137 = vmatpush1.msra.mxu0 0.0
        %1138 = vmatprep.mubr.f32.mxu0 0.0
        %v1139 = vand.u32 %v537, 4294901760
        %1140 = vmatmul.mubr.f32.gmra.mrb[0].mxu0 %v1139
        %v1141 = vpop.f32.mrb[0].mxu0
        %v1142 = vadd.f32 %v1047, %v1141
        %v1143 = vpop.f32.mrb[0].mxu0
        %v1144 = vadd.f32 %v1049, %v1143
        %1145 = vmatprep.mubr.f32.mxu0 0.0
        %v1146 = vand.u32 %v540, 4294901760
        %1147 = vmatmul.mubr.f32.gmra.mrb[0].mxu0 %v1146
        %v1148 = vpop.f32.mrb[0].mxu0
        %v1149 = vadd.f32 %v1054, %v1148
        %v1150 = vpop.f32.mrb[0].mxu0
        %v1151 = vadd.f32 %v1056, %v1150
        %1152 = vmatprep.mubr.f32.mxu0 0.0
        %v1153 = vand.u32 %v543, 4294901760
        %1154 = vmatmul.mubr.f32.gmra.mrb[0].mxu0 %v1153
        %v1155 = vpop.f32.mrb[0].mxu0
        %v1156 = vadd.f32 %v1061, %v1155
        %v1157 = vpop.f32.mrb[0].mxu0
        %v1158 = vadd.f32 %v1063, %v1157
        %1159 = vmatprep.mubr.f32.mxu0 0.0
        %v1160 = vand.u32 %v546, 4294901760
        %1161 = vmatmul.mubr.f32.gmra.mrb[0].mxu0 %v1160
        %v1162 = vpop.f32.mrb[0].mxu0
        %v1163 = vadd.f32 %v1068, %v1162
        %v1164 = vpop.f32.mrb[0].mxu0
        %v1165 = vadd.f32 %v1070, %v1164
        %1166 = vdwg.mxu0
        %v1167 = vmul.f32 %v1142, 0.5
        %v1168 = vmul.f32 %v1144, 0.5
        %v1169 = vmul.f32 %v1149, 0.5
        %v1170 = vmul.f32 %v1151, 0.5
        %v1171 = vmul.f32 %v1156, 0.5
        %v1172 = vmul.f32 %v1158, 0.5
        %v1173 = vmul.f32 %v1163, 0.5
        %v1174 = vmul.f32 %v1165, 0.5
        %v1175 = vmul.f32 %v1142, 0.044715
        %v1176 = vmul.f32 %v1144, 0.044715
        %v1177 = vmul.f32 %v1149, 0.044715
        %v1178 = vmul.f32 %v1151, 0.044715
        %v1179 = vmul.f32 %v1156, 0.044715
        %v1180 = vmul.f32 %v1158, 0.044715
        %v1181 = vmul.f32 %v1163, 0.044715
        %v1182 = vmul.f32 %v1165, 0.044715
        %v1183 = vmul.f32 %v1175, %v1142
        %v1184 = vmul.f32 %v1176, %v1144
        %v1185 = vmul.f32 %v1177, %v1149
        %v1186 = vmul.f32 %v1178, %v1151
        %v1187 = vmul.f32 %v1179, %v1156
        %v1188 = vmul.f32 %v1180, %v1158
        %v1189 = vmul.f32 %v1181, %v1163
        %v1190 = vmul.f32 %v1182, %v1165
        %v1191 = vmul.f32 %v1183, %v1142
        %v1192 = vmul.f32 %v1184, %v1144
        %v1193 = vmul.f32 %v1185, %v1149
        %v1194 = vmul.f32 %v1186, %v1151
        %v1195 = vmul.f32 %v1187, %v1156
        %v1196 = vmul.f32 %v1188, %v1158
        %v1197 = vmul.f32 %v1189, %v1163
        %v1198 = vmul.f32 %v1190, %v1165
        %v1199 = vadd.f32 %v1142, %v1191
        %v1200 = vadd.f32 %v1144, %v1192
        %v1201 = vadd.f32 %v1149, %v1193
        %v1202 = vadd.f32 %v1151, %v1194
        %v1203 = vadd.f32 %v1156, %v1195
        %v1204 = vadd.f32 %v1158, %v1196
        %v1205 = vadd.f32 %v1163, %v1197
        %v1206 = vadd.f32 %v1165, %v1198
        %v1207 = vmul.f32 %v1199, 0.7978846
        %v1208 = vmul.f32 %v1200, 0.7978846
        %v1209 = vmul.f32 %v1201, 0.7978846
        %v1210 = vmul.f32 %v1202, 0.7978846
        %v1211 = vmul.f32 %v1203, 0.7978846
        %v1212 = vmul.f32 %v1204, 0.7978846
        %v1213 = vmul.f32 %v1205, 0.7978846
        %v1214 = vmul.f32 %v1206, 0.7978846
        %v1215 = vtanh.pop %v1207
        %v1216 = vtanh.pop %v1208
        %v1217 = vtanh.pop %v1209
        %v1218 = vtanh.pop %v1210
        %v1219 = vtanh.pop %v1211
        %v1220 = vtanh.pop %v1212
        %v1221 = vtanh.pop %v1213
        %v1222 = vtanh.pop %v1214
        %v1223 = vadd.f32 %v1215, 1.0
        %v1224 = vadd.f32 %v1216, 1.0
        %v1225 = vadd.f32 %v1217, 1.0
        %v1226 = vadd.f32 %v1218, 1.0
        %v1227 = vadd.f32 %v1219, 1.0
        %v1228 = vadd.f32 %v1220, 1.0
        %v1229 = vadd.f32 %v1221, 1.0
        %v1230 = vadd.f32 %v1222, 1.0
        %v1231 = vmul.f32 %v1167, %v1223
        %v1232 = vmul.f32 %v1168, %v1224
        %v1233 = vmul.f32 %v1169, %v1225
        %v1234 = vmul.f32 %v1170, %v1226
        %v1235 = vmul.f32 %v1171, %v1227
        %v1236 = vmul.f32 %v1172, %v1228
        %v1237 = vmul.f32 %v1173, %v1229
        %v1238 = vmul.f32 %v1174, %v1230
        %v1239 = vld [vmem:[%s4] sm:$0xff]
        %v1240 = vld [vmem:[%s4 + $0x8] sm:$0xff]
        %v1241 = vld [vmem:[%s4 + $0x10] sm:$0xff]
        %v1242 = vld [vmem:[%s4 + $0x18] sm:$0xff]
        %v1243 = vld [vmem:[%s5] sm:$0xff]
        %v1244 = vld [vmem:[%s5 + $0x8] sm:$0xff]
        %v1245 = vld [vmem:[%s5 + $0x10] sm:$0xff]
        %v1246 = vld [vmem:[%s5 + $0x18] sm:$0xff]
        %1248 = vset.pattern.permute.xlu0 0
        %1249 = vperm.xlu0 %1248, %v1243
        %v1250 = vpop.permute.xlu0 %1249
        %1253 = vset.pattern.permute.xlu0 0
        %1254 = vperm.xlu0 %1253, %v1244
        %v1255 = vpop.permute.xlu0 %1254
        %1258 = vset.pattern.permute.xlu0 0
        %1259 = vperm.xlu0 %1258, %v1245
        %v1260 = vpop.permute.xlu0 %1259
        %1263 = vset.pattern.permute.xlu0 0
        %1264 = vperm.xlu0 %1263, %v1246
        %v1265 = vpop.permute.xlu0 %1264
        %v1268 = vsel %vm365, %v1239, 0
        %v1271 = vsel %vm365, %v1240, 0
        %v1274 = vsel %vm365, %v1241, 0
        %v1277 = vsel %vm365, %v1242, 0
        %v1279 = vand.u32 %v1232, 4294901760
        %1280 = vmatprep.subr.mxu0 %v1279
        %v1281 = vand.u32 %v1231, 4294901760
        %1282 = vmatpush1.msra.mxu0 %v1281
        %v1283 = vand.u32 %v1234, 4294901760
        %1284 = vmatprep.subr.mxu0 %v1283
        %v1285 = vand.u32 %v1233, 4294901760
        %1286 = vmatpush1.msra.mxu0 %v1285
        %v1287 = vand.u32 %v1236, 4294901760
        %1288 = vmatprep.subr.mxu0 %v1287
        %v1289 = vand.u32 %v1235, 4294901760
        %1290 = vmatpush1.msra.mxu0 %v1289
        %v1291 = vand.u32 %v1238, 4294901760
        %1292 = vmatprep.subr.mxu0 %v1291
        %v1293 = vand.u32 %v1237, 4294901760
        %1294 = vmatpush1.msra.mxu0 %v1293
        %1295 = vmatprep.subr.mxu0 0.0
        %1296 = vmatpush1.msra.mxu0 0.0
        %1297 = vmatprep.subr.mxu0 0.0
        %1298 = vmatpush1.msra.mxu0 0.0
        %1299 = vmatprep.subr.mxu0 0.0
        %1300 = vmatpush1.msra.mxu0 0.0
        %1301 = vmatprep.subr.mxu0 0.0
        %1302 = vmatpush1.msra.mxu0 0.0
        %1303 = vmatprep.subr.mxu0 0.0
        %1304 = vmatpush1.msra.mxu0 0.0
        %1305 = vmatprep.subr.mxu0 0.0
        %1306 = vmatpush1.msra.mxu0 0.0
        %1307 = vmatprep.subr.mxu0 0.0
        %1308 = vmatpush1.msra.mxu0 0.0
        %1309 = vmatprep.subr.mxu0 0.0
        %1310 = vmatpush1.msra.mxu0 0.0
        %1311 = vmatprep.subr.mxu0 0.0
        %1312 = vmatpush1.msra.mxu0 0.0
        %1313 = vmatprep.subr.mxu0 0.0
        %1314 = vmatpush1.msra.mxu0 0.0
        %1315 = vmatprep.subr.mxu0 0.0
        %1316 = vmatpush1.msra.mxu0 0.0
        %1317 = vmatprep.subr.mxu0 0.0
        %1318 = vmatpush1.msra.mxu0 0.0
        %1319 = vmatprep.subr.mxu0 0.0
        %1320 = vmatpush1.msra.mxu0 0.0
        %1321 = vmatprep.subr.mxu0 0.0
        %1322 = vmatpush1.msra.mxu0 0.0
        %1323 = vmatprep.subr.mxu0 0.0
        %1324 = vmatpush1.msra.mxu0 0.0
        %1325 = vmatprep.subr.mxu0 0.0
        %1326 = vmatpush1.msra.mxu0 0.0
        %1327 = vmatprep.subr.mxu0 0.0
        %1328 = vmatpush1.msra.mxu0 0.0
        %1329 = vmatprep.subr.mxu0 0.0
        %1330 = vmatpush1.msra.mxu0 0.0
        %1331 = vmatprep.subr.mxu0 0.0
        %1332 = vmatpush1.msra.mxu0 0.0
        %1333 = vmatprep.subr.mxu0 0.0
        %1334 = vmatpush1.msra.mxu0 0.0
        %1335 = vmatprep.subr.mxu0 0.0
        %1336 = vmatpush1.msra.mxu0 0.0
        %1337 = vmatprep.subr.mxu0 0.0
        %1338 = vmatpush1.msra.mxu0 0.0
        %1339 = vmatprep.subr.mxu0 0.0
        %1340 = vmatpush1.msra.mxu0 0.0
        %1341 = vmatprep.subr.mxu0 0.0
        %1342 = vmatpush1.msra.mxu0 0.0
        %1343 = vmatprep.subr.mxu0 0.0
        %1344 = vmatpush1.msra.mxu0 0.0
        %1345 = vmatprep.subr.mxu0 0.0
        %1346 = vmatpush1.msra.mxu0 0.0
        %1347 = vmatprep.subr.mxu0 0.0
        %1348 = vmatpush1.msra.mxu0 0.0
        %1349 = vmatprep.subr.mxu0 0.0
        %1350 = vmatpush1.msra.mxu0 0.0
        %1351 = vmatprep.mubr.f32.mxu0 0.0
        %v1352 = vand.u32 %v1268, 4294901760
        %v1353 = vsub.f32 %v1268, %v1352
        %v1354 = vand.u32 %v1353, 4294901760
        %v1355 = vsub.f32 %v1353, %v1354
        %v1356 = vand.u32 %v1355, 4294901760
        %1357 = vmatmul.mubr.f32.gmra.mrb[0].mxu0 %v1356
        %v1358 = vpop.f32.mrb[0].mxu0
        %v1359 = vadd.f32 %v1250, %v1358
        %v1360 = vpop.f32.mrb[0].mxu0
        %v1361 = vadd.f32 %v1250, %v1360
        %1362 = vmatprep.mubr.f32.mxu0 0.0
        %v1363 = vand.u32 %v1271, 4294901760
        %v1364 = vsub.f32 %v1271, %v1363
        %v1365 = vand.u32 %v1364, 4294901760
        %v1366 = vsub.f32 %v1364, %v1365
        %v1367 = vand.u32 %v1366, 4294901760
        %1368 = vmatmul.mubr.f32.gmra.mrb[0].mxu0 %v1367
        %v1369 = vpop.f32.mrb[0].mxu0
        %v1370 = vadd.f32 %v1255, %v1369
        %v1371 = vpop.f32.mrb[0].mxu0
        %v1372 = vadd.f32 %v1255, %v1371
        %1373 = vmatprep.mubr.f32.mxu0 0.0
        %v1374 = vand.u32 %v1274, 4294901760
        %v1375 = vsub.f32 %v1274, %v1374
        %v1376 = vand.u32 %v1375, 4294901760
        %v1377 = vsub.f32 %v1375, %v1376
        %v1378 = vand.u32 %v1377, 4294901760
        %1379 = vmatmul.mubr.f32.gmra.mrb[0].mxu0 %v1378
        %v1380 = vpop.f32.mrb[0].mxu0
        %v1381 = vadd.f32 %v1260, %v1380
        %v1382 = vpop.f32.mrb[0].mxu0
        %v1383 = vadd.f32 %v1260, %v1382
        %1384 = vmatprep.mubr.f32.mxu0 0.0
        %v1385 = vand.u32 %v1277, 4294901760
        %v1386 = vsub.f32 %v1277, %v1385
        %v1387 = vand.u32 %v1386, 4294901760
        %v1388 = vsub.f32 %v1386, %v1387
        %v1389 = vand.u32 %v1388, 4294901760
        %1390 = vmatmul.mubr.f32.gmra.mrb[0].mxu0 %v1389
        %v1391 = vpop.f32.mrb[0].mxu0
        %v1392 = vadd.f32 %v1265, %v1391
        %v1393 = vpop.f32.mrb[0].mxu0
        %v1394 = vadd.f32 %v1265, %v1393
        %1395 = vdwg.mxu0
        %v1396 = vand.u32 %v1232, 4294901760
        %v1397 = vsub.f32 %v1232, %v1396
        %v1398 = vand.u32 %v1397, 4294901760
        %v1399 = vsub.f32 %v1397, %v1398
        %v1400 = vand.u32 %v1399, 4294901760
        %1401 = vmatprep.subr.mxu0 %v1400
        %v1402 = vand.u32 %v1231, 4294901760
        %v1403 = vsub.f32 %v1231, %v1402
        %v1404 = vand.u32 %v1403, 4294901760
        %v1405 = vsub.f32 %v1403, %v1404
        %v1406 = vand.u32 %v1405, 4294901760
        %1407 = vmatpush1.msra.mxu0 %v1406
        %v1408 = vand.u32 %v1234, 4294901760
        %v1409 = vsub.f32 %v1234, %v1408
        %v1410 = vand.u32 %v1409, 4294901760
        %v1411 = vsub.f32 %v1409, %v1410
        %v1412 = vand.u32 %v1411, 4294901760
        %1413 = vmatprep.subr.mxu0 %v1412
        %v1414 = vand.u32 %v1233, 4294901760
        %v1415 = vsub.f32 %v1233, %v1414
        %v1416 = vand.u32 %v1415, 4294901760
        %v1417 = vsub.f32 %v1415, %v1416
        %v1418 = vand.u32 %v1417, 4294901760
        %1419 = vmatpush1.msra.mxu0 %v1418
        %v1420 = vand.u32 %v1236, 4294901760
        %v1421 = vsub.f32 %v1236, %v1420
        %v1422 = vand.u32 %v1421, 4294901760
        %v1423 = vsub.f32 %v1421, %v1422
        %v1424 = vand.u32 %v1423, 4294901760
        %1425 = vmatprep.subr.mxu0 %v1424
        %v1426 = vand.u32 %v1235, 4294901760
        %v1427 = vsub.f32 %v1235, %v1426
        %v1428 = vand.u32 %v1427, 4294901760
        %v1429 = vsub.f32 %v1427, %v1428
        %v1430 = vand.u32 %v1429, 4294901760
        %1431 = vmatpush1.msra.mxu0 %v1430
        %v1432 = vand.u32 %v1238, 4294901760
        %v1433 = vsub.f32 %v1238, %v1432
        %v1434 = vand.u32 %v1433, 4294901760
        %v1435 = vsub.f32 %v1433, %v1434
        %v1436 = vand.u32 %v1435, 4294901760
        %1437 = vmatprep.subr.mxu0 %v1436
        %v1438 = vand.u32 %v1237, 4294901760
        %v1439 = vsub.f32 %v1237, %v1438
        %v1440 = vand.u32 %v1439, 4294901760
        %v1441 = vsub.f32 %v1439, %v1440
        %v1442 = vand.u32 %v1441, 4294901760
        %1443 = vmatpush1.msra.mxu0 %v1442
        %1444 = vmatprep.subr.mxu0 0.0
        %1445 = vmatpush1.msra.mxu0 0.0
        %1446 = vmatprep.subr.mxu0 0.0
        %1447 = vmatpush1.msra.mxu0 0.0
        %1448 = vmatprep.subr.mxu0 0.0
        %1449 = vmatpush1.msra.mxu0 0.0
        %1450 = vmatprep.subr.mxu0 0.0
        %1451 = vmatpush1.msra.mxu0 0.0
        %1452 = vmatprep.subr.mxu0 0.0
        %1453 = vmatpush1.msra.mxu0 0.0
        %1454 = vmatprep.subr.mxu0 0.0
        %1455 = vmatpush1.msra.mxu0 0.0
        %1456 = vmatprep.subr.mxu0 0.0
        %1457 = vmatpush1.msra.mxu0 0.0
        %1458 = vmatprep.subr.mxu0 0.0
        %1459 = vmatpush1.msra.mxu0 0.0
        %1460 = vmatprep.subr.mxu0 0.0
        %1461 = vmatpush1.msra.mxu0 0.0
        %1462 = vmatprep.subr.mxu0 0.0
        %1463 = vmatpush1.msra.mxu0 0.0
        %1464 = vmatprep.subr.mxu0 0.0
        %1465 = vmatpush1.msra.mxu0 0.0
        %1466 = vmatprep.subr.mxu0 0.0
        %1467 = vmatpush1.msra.mxu0 0.0
        %1468 = vmatprep.subr.mxu0 0.0
        %1469 = vmatpush1.msra.mxu0 0.0
        %1470 = vmatprep.subr.mxu0 0.0
        %1471 = vmatpush1.msra.mxu0 0.0
        %1472 = vmatprep.subr.mxu0 0.0
        %1473 = vmatpush1.msra.mxu0 0.0
        %1474 = vmatprep.subr.mxu0 0.0
        %1475 = vmatpush1.msra.mxu0 0.0
        %1476 = vmatprep.subr.mxu0 0.0
        %1477 = vmatpush1.msra.mxu0 0.0
        %1478 = vmatprep.subr.mxu0 0.0
        %1479 = vmatpush1.msra.mxu0 0.0
        %1480 = vmatprep.subr.mxu0 0.0
        %1481 = vmatpush1.msra.mxu0 0.0
        %1482 = vmatprep.subr.mxu0 0.0
        %1483 = vmatpush1.msra.mxu0 0.0
        %1484 = vmatprep.subr.mxu0 0.0
        %1485 = vmatpush1.msra.mxu0 0.0
        %1486 = vmatprep.subr.mxu0 0.0
        %1487 = vmatpush1.msra.mxu0 0.0
        %1488 = vmatprep.subr.mxu0 0.0
        %1489 = vmatpush1.msra.mxu0 0.0
        %1490 = vmatprep.subr.mxu0 0.0
        %1491 = vmatpush1.msra.mxu0 0.0
        %1492 = vmatprep.subr.mxu0 0.0
        %1493 = vmatpush1.msra.mxu0 0.0
        %1494 = vmatprep.subr.mxu0 0.0
        %1495 = vmatpush1.msra.mxu0 0.0
        %1496 = vmatprep.subr.mxu0 0.0
        %1497 = vmatpush1.msra.mxu0 0.0
        %1498 = vmatprep.subr.mxu0 0.0
        %1499 = vmatpush1.msra.mxu0 0.0
        %1500 = vmatprep.mubr.f32.mxu0 0.0
        %v1501 = vand.u32 %v1268, 4294901760
        %1502 = vmatmul.mubr.f32.gmra.mrb[0].mxu0 %v1501
        %v1503 = vpop.f32.mrb[0].mxu0
        %v1504 = vadd.f32 %v1359, %v1503
        %v1505 = vpop.f32.mrb[0].mxu0
        %v1506 = vadd.f32 %v1361, %v1505
        %1507 = vmatprep.mubr.f32.mxu0 0.0
        %v1508 = vand.u32 %v1271, 4294901760
        %1509 = vmatmul.mubr.f32.gmra.mrb[0].mxu0 %v1508
        %v1510 = vpop.f32.mrb[0].mxu0
        %v1511 = vadd.f32 %v1370, %v1510
        %v1512 = vpop.f32.mrb[0].mxu0
        %v1513 = vadd.f32 %v1372, %v1512
        %1514 = vmatprep.mubr.f32.mxu0 0.0
        %v1515 = vand.u32 %v1274, 4294901760
        %1516 = vmatmul.mubr.f32.gmra.mrb[0].mxu0 %v1515
        %v1517 = vpop.f32.mrb[0].mxu0
        %v1518 = vadd.f32 %v1381, %v1517
        %v1519 = vpop.f32.mrb[0].mxu0
        %v1520 = vadd.f32 %v1383, %v1519
        %1521 = vmatprep.mubr.f32.mxu0 0.0
        %v1522 = vand.u32 %v1277, 4294901760
        %1523 = vmatmul.mubr.f32.gmra.mrb[0].mxu0 %v1522
        %v1524 = vpop.f32.mrb[0].mxu0
        %v1525 = vadd.f32 %v1392, %v1524
        %v1526 = vpop.f32.mrb[0].mxu0
        %v1527 = vadd.f32 %v1394, %v1526
        %1528 = vdwg.mxu0
        %v1529 = vand.u32 %v1232, 4294901760
        %v1530 = vsub.f32 %v1232, %v1529
        %1531 = vmatprep.subr.mxu0 %v1530
        %v1532 = vand.u32 %v1231, 4294901760
        %v1533 = vsub.f32 %v1231, %v1532
        %1534 = vmatpush1.msra.mxu0 %v1533
        %v1535 = vand.u32 %v1234, 4294901760
        %v1536 = vsub.f32 %v1234, %v1535
        %1537 = vmatprep.subr.mxu0 %v1536
        %v1538 = vand.u32 %v1233, 4294901760
        %v1539 = vsub.f32 %v1233, %v1538
        %1540 = vmatpush1.msra.mxu0 %v1539
        %v1541 = vand.u32 %v1236, 4294901760
        %v1542 = vsub.f32 %v1236, %v1541
        %1543 = vmatprep.subr.mxu0 %v1542
        %v1544 = vand.u32 %v1235, 4294901760
        %v1545 = vsub.f32 %v1235, %v1544
        %1546 = vmatpush1.msra.mxu0 %v1545
        %v1547 = vand.u32 %v1238, 4294901760
        %v1548 = vsub.f32 %v1238, %v1547
        %1549 = vmatprep.subr.mxu0 %v1548
        %v1550 = vand.u32 %v1237, 4294901760
        %v1551 = vsub.f32 %v1237, %v1550
        %1552 = vmatpush1.msra.mxu0 %v1551
        %1553 = vmatprep.subr.mxu0 0.0
        %1554 = vmatpush1.msra.mxu0 0.0
        %1555 = vmatprep.subr.mxu0 0.0
        %1556 = vmatpush1.msra.mxu0 0.0
        %1557 = vmatprep.subr.mxu0 0.0
        %1558 = vmatpush1.msra.mxu0 0.0
        %1559 = vmatprep.subr.mxu0 0.0
        %1560 = vmatpush1.msra.mxu0 0.0
        %1561 = vmatprep.subr.mxu0 0.0
        %1562 = vmatpush1.msra.mxu0 0.0
        %1563 = vmatprep.subr.mxu0 0.0
        %1564 = vmatpush1.msra.mxu0 0.0
        %1565 = vmatprep.subr.mxu0 0.0
        %1566 = vmatpush1.msra.mxu0 0.0
        %1567 = vmatprep.subr.mxu0 0.0
        %1568 = vmatpush1.msra.mxu0 0.0
        %1569 = vmatprep.subr.mxu0 0.0
        %1570 = vmatpush1.msra.mxu0 0.0
        %1571 = vmatprep.subr.mxu0 0.0
        %1572 = vmatpush1.msra.mxu0 0.0
        %1573 = vmatprep.subr.mxu0 0.0
        %1574 = vmatpush1.msra.mxu0 0.0
        %1575 = vmatprep.subr.mxu0 0.0
        %1576 = vmatpush1.msra.mxu0 0.0
        %1577 = vmatprep.subr.mxu0 0.0
        %1578 = vmatpush1.msra.mxu0 0.0
        %1579 = vmatprep.subr.mxu0 0.0
        %1580 = vmatpush1.msra.mxu0 0.0
        %1581 = vmatprep.subr.mxu0 0.0
        %1582 = vmatpush1.msra.mxu0 0.0
        %1583 = vmatprep.subr.mxu0 0.0
        %1584 = vmatpush1.msra.mxu0 0.0
        %1585 = vmatprep.subr.mxu0 0.0
        %1586 = vmatpush1.msra.mxu0 0.0
        %1587 = vmatprep.subr.mxu0 0.0
        %1588 = vmatpush1.msra.mxu0 0.0
        %1589 = vmatprep.subr.mxu0 0.0
        %1590 = vmatpush1.msra.mxu0 0.0
        %1591 = vmatprep.subr.mxu0 0.0
        %1592 = vmatpush1.msra.mxu0 0.0
        %1593 = vmatprep.subr.mxu0 0.0
        %1594 = vmatpush1.msra.mxu0 0.0
        %1595 = vmatprep.subr.mxu0 0.0
        %1596 = vmatpush1.msra.mxu0 0.0
        %1597 = vmatprep.subr.mxu0 0.0
        %1598 = vmatpush1.msra.mxu0 0.0
        %1599 = vmatprep.subr.mxu0 0.0
        %1600 = vmatpush1.msra.mxu0 0.0
        %1601 = vmatprep.subr.mxu0 0.0
        %1602 = vmatpush1.msra.mxu0 0.0
        %1603 = vmatprep.subr.mxu0 0.0
        %1604 = vmatpush1.msra.mxu0 0.0
        %1605 = vmatprep.subr.mxu0 0.0
        %1606 = vmatpush1.msra.mxu0 0.0
        %1607 = vmatprep.subr.mxu0 0.0
        %1608 = vmatpush1.msra.mxu0 0.0
        %1609 = vmatprep.mubr.f32.mxu0 0.0
        %v1610 = vand.u32 %v1268, 4294901760
        %v1611 = vsub.f32 %v1268, %v1610
        %1612 = vmatmul.mubr.f32.gmra.mrb[0].mxu0 %v1611
        %v1613 = vpop.f32.mrb[0].mxu0
        %v1614 = vadd.f32 %v1504, %v1613
        %v1615 = vpop.f32.mrb[0].mxu0
        %v1616 = vadd.f32 %v1506, %v1615
        %1617 = vmatprep.mubr.f32.mxu0 0.0
        %v1618 = vand.u32 %v1271, 4294901760
        %v1619 = vsub.f32 %v1271, %v1618
        %1620 = vmatmul.mubr.f32.gmra.mrb[0].mxu0 %v1619
        %v1621 = vpop.f32.mrb[0].mxu0
        %v1622 = vadd.f32 %v1511, %v1621
        %v1623 = vpop.f32.mrb[0].mxu0
        %v1624 = vadd.f32 %v1513, %v1623
        %1625 = vmatprep.mubr.f32.mxu0 0.0
        %v1626 = vand.u32 %v1274, 4294901760
        %v1627 = vsub.f32 %v1274, %v1626
        %1628 = vmatmul.mubr.f32.gmra.mrb[0].mxu0 %v1627
        %v1629 = vpop.f32.mrb[0].mxu0
        %v1630 = vadd.f32 %v1518, %v1629
        %v1631 = vpop.f32.mrb[0].mxu0
        %v1632 = vadd.f32 %v1520, %v1631
        %1633 = vmatprep.mubr.f32.mxu0 0.0
        %v1634 = vand.u32 %v1277, 4294901760
        %v1635 = vsub.f32 %v1277, %v1634
        %1636 = vmatmul.mubr.f32.gmra.mrb[0].mxu0 %v1635
        %v1637 = vpop.f32.mrb[0].mxu0
        %v1638 = vadd.f32 %v1525, %v1637
        %v1639 = vpop.f32.mrb[0].mxu0
        %v1640 = vadd.f32 %v1527, %v1639
        %1641 = vdwg.mxu0
        %v1642 = vand.u32 %v1232, 4294901760
        %1643 = vmatprep.subr.mxu0 %v1642
        %v1644 = vand.u32 %v1231, 4294901760
        %1645 = vmatpush1.msra.mxu0 %v1644
        %v1646 = vand.u32 %v1234, 4294901760
        %1647 = vmatprep.subr.mxu0 %v1646
        %v1648 = vand.u32 %v1233, 4294901760
        %1649 = vmatpush1.msra.mxu0 %v1648
        %v1650 = vand.u32 %v1236, 4294901760
        %1651 = vmatprep.subr.mxu0 %v1650
        %v1652 = vand.u32 %v1235, 4294901760
        %1653 = vmatpush1.msra.mxu0 %v1652
        %v1654 = vand.u32 %v1238, 4294901760
        %1655 = vmatprep.subr.mxu0 %v1654
        %v1656 = vand.u32 %v1237, 4294901760
        %1657 = vmatpush1.msra.mxu0 %v1656
        %1658 = vmatprep.subr.mxu0 0.0
        %1659 = vmatpush1.msra.mxu0 0.0
        %1660 = vmatprep.subr.mxu0 0.0
        %1661 = vmatpush1.msra.mxu0 0.0
        %1662 = vmatprep.subr.mxu0 0.0
        %1663 = vmatpush1.msra.mxu0 0.0
        %1664 = vmatprep.subr.mxu0 0.0
        %1665 = vmatpush1.msra.mxu0 0.0
        %1666 = vmatprep.subr.mxu0 0.0
        %1667 = vmatpush1.msra.mxu0 0.0
        %1668 = vmatprep.subr.mxu0 0.0
        %1669 = vmatpush1.msra.mxu0 0.0
        %1670 = vmatprep.subr.mxu0 0.0
        %1671 = vmatpush1.msra.mxu0 0.0
        %1672 = vmatprep.subr.mxu0 0.0
        %1673 = vmatpush1.msra.mxu0 0.0
        %1674 = vmatprep.subr.mxu0 0.0
        %1675 = vmatpush1.msra.mxu0 0.0
        %1676 = vmatprep.subr.mxu0 0.0
        %1677 = vmatpush1.msra.mxu0 0.0
        %1678 = vmatprep.subr.mxu0 0.0
        %1679 = vmatpush1.msra.mxu0 0.0
        %1680 = vmatprep.subr.mxu0 0.0
        %1681 = vmatpush1.msra.mxu0 0.0
        %1682 = vmatprep.subr.mxu0 0.0
        %1683 = vmatpush1.msra.mxu0 0.0
        %1684 = vmatprep.subr.mxu0 0.0
        %1685 = vmatpush1.msra.mxu0 0.0
        %1686 = vmatprep.subr.mxu0 0.0
        %1687 = vmatpush1.msra.mxu0 0.0
        %1688 = vmatprep.subr.mxu0 0.0
        %1689 = vmatpush1.msra.mxu0 0.0
        %1690 = vmatprep.subr.mxu0 0.0
        %1691 = vmatpush1.msra.mxu0 0.0
        %1692 = vmatprep.subr.mxu0 0.0
        %1693 = vmatpush1.msra.mxu0 0.0
        %1694 = vmatprep.subr.mxu0 0.0
        %1695 = vmatpush1.msra.mxu0 0.0
        %1696 = vmatprep.subr.mxu0 0.0
        %1697 = vmatpush1.msra.mxu0 0.0
        %1698 = vmatprep.subr.mxu0 0.0
        %1699 = vmatpush1.msra.mxu0 0.0
        %1700 = vmatprep.subr.mxu0 0.0
        %1701 = vmatpush1.msra.mxu0 0.0
        %1702 = vmatprep.subr.mxu0 0.0
        %1703 = vmatpush1.msra.mxu0 0.0
        %1704 = vmatprep.subr.mxu0 0.0
        %1705 = vmatpush1.msra.mxu0 0.0
        %1706 = vmatprep.subr.mxu0 0.0
        %1707 = vmatpush1.msra.mxu0 0.0
        %1708 = vmatprep.subr.mxu0 0.0
        %1709 = vmatpush1.msra.mxu0 0.0
        %1710 = vmatprep.subr.mxu0 0.0
        %1711 = vmatpush1.msra.mxu0 0.0
        %1712 = vmatprep.subr.mxu0 0.0
        %1713 = vmatpush1.msra.mxu0 0.0
        %1714 = vmatprep.mubr.f32.mxu0 0.0
        %v1715 = vand.u32 %v1268, 4294901760
        %v1716 = vsub.f32 %v1268, %v1715
        %v1717 = vand.u32 %v1716, 4294901760
        %1718 = vmatmul.mubr.f32.gmra.mrb[0].mxu0 %v1717
        %v1719 = vpop.f32.mrb[0].mxu0
        %v1720 = vadd.f32 %v1614, %v1719
        %v1721 = vpop.f32.mrb[0].mxu0
        %v1722 = vadd.f32 %v1616, %v1721
        %1723 = vmatprep.mubr.f32.mxu0 0.0
        %v1724 = vand.u32 %v1271, 4294901760
        %v1725 = vsub.f32 %v1271, %v1724
        %v1726 = vand.u32 %v1725, 4294901760
        %1727 = vmatmul.mubr.f32.gmra.mrb[0].mxu0 %v1726
        %v1728 = vpop.f32.mrb[0].mxu0
        %v1729 = vadd.f32 %v1622, %v1728
        %v1730 = vpop.f32.mrb[0].mxu0
        %v1731 = vadd.f32 %v1624, %v1730
        %1732 = vmatprep.mubr.f32.mxu0 0.0
        %v1733 = vand.u32 %v1274, 4294901760
        %v1734 = vsub.f32 %v1274, %v1733
        %v1735 = vand.u32 %v1734, 4294901760
        %1736 = vmatmul.mubr.f32.gmra.mrb[0].mxu0 %v1735
        %v1737 = vpop.f32.mrb[0].mxu0
        %v1738 = vadd.f32 %v1630, %v1737
        %v1739 = vpop.f32.mrb[0].mxu0
        %v1740 = vadd.f32 %v1632, %v1739
        %1741 = vmatprep.mubr.f32.mxu0 0.0
        %v1742 = vand.u32 %v1277, 4294901760
        %v1743 = vsub.f32 %v1277, %v1742
        %v1744 = vand.u32 %v1743, 4294901760
        %1745 = vmatmul.mubr.f32.gmra.mrb[0].mxu0 %v1744
        %v1746 = vpop.f32.mrb[0].mxu0
        %v1747 = vadd.f32 %v1638, %v1746
        %v1748 = vpop.f32.mrb[0].mxu0
        %v1749 = vadd.f32 %v1640, %v1748
        %1750 = vdwg.mxu0
        %v1751 = vand.u32 %v1232, 4294901760
        %v1752 = vsub.f32 %v1232, %v1751
        %v1753 = vand.u32 %v1752, 4294901760
        %1754 = vmatprep.subr.mxu0 %v1753
        %v1755 = vand.u32 %v1231, 4294901760
        %v1756 = vsub.f32 %v1231, %v1755
        %v1757 = vand.u32 %v1756, 4294901760
        %1758 = vmatpush1.msra.mxu0 %v1757
        %v1759 = vand.u32 %v1234, 4294901760
        %v1760 = vsub.f32 %v1234, %v1759
        %v1761 = vand.u32 %v1760, 4294901760
        %1762 = vmatprep.subr.mxu0 %v1761
        %v1763 = vand.u32 %v1233, 4294901760
        %v1764 = vsub.f32 %v1233, %v1763
        %v1765 = vand.u32 %v1764, 4294901760
        %1766 = vmatpush1.msra.mxu0 %v1765
        %v1767 = vand.u32 %v1236, 4294901760
        %v1768 = vsub.f32 %v1236, %v1767
        %v1769 = vand.u32 %v1768, 4294901760
        %1770 = vmatprep.subr.mxu0 %v1769
        %v1771 = vand.u32 %v1235, 4294901760
        %v1772 = vsub.f32 %v1235, %v1771
        %v1773 = vand.u32 %v1772, 4294901760
        %1774 = vmatpush1.msra.mxu0 %v1773
        %v1775 = vand.u32 %v1238, 4294901760
        %v1776 = vsub.f32 %v1238, %v1775
        %v1777 = vand.u32 %v1776, 4294901760
        %1778 = vmatprep.subr.mxu0 %v1777
        %v1779 = vand.u32 %v1237, 4294901760
        %v1780 = vsub.f32 %v1237, %v1779
        %v1781 = vand.u32 %v1780, 4294901760
        %1782 = vmatpush1.msra.mxu0 %v1781
        %1783 = vmatprep.subr.mxu0 0.0
        %1784 = vmatpush1.msra.mxu0 0.0
        %1785 = vmatprep.subr.mxu0 0.0
        %1786 = vmatpush1.msra.mxu0 0.0
        %1787 = vmatprep.subr.mxu0 0.0
        %1788 = vmatpush1.msra.mxu0 0.0
        %1789 = vmatprep.subr.mxu0 0.0
        %1790 = vmatpush1.msra.mxu0 0.0
        %1791 = vmatprep.subr.mxu0 0.0
        %1792 = vmatpush1.msra.mxu0 0.0
        %1793 = vmatprep.subr.mxu0 0.0
        %1794 = vmatpush1.msra.mxu0 0.0
        %1795 = vmatprep.subr.mxu0 0.0
        %1796 = vmatpush1.msra.mxu0 0.0
        %1797 = vmatprep.subr.mxu0 0.0
        %1798 = vmatpush1.msra.mxu0 0.0
        %1799 = vmatprep.subr.mxu0 0.0
        %1800 = vmatpush1.msra.mxu0 0.0
        %1801 = vmatprep.subr.mxu0 0.0
        %1802 = vmatpush1.msra.mxu0 0.0
        %1803 = vmatprep.subr.mxu0 0.0
        %1804 = vmatpush1.msra.mxu0 0.0
        %1805 = vmatprep.subr.mxu0 0.0
        %1806 = vmatpush1.msra.mxu0 0.0
        %1807 = vmatprep.subr.mxu0 0.0
        %1808 = vmatpush1.msra.mxu0 0.0
        %1809 = vmatprep.subr.mxu0 0.0
        %1810 = vmatpush1.msra.mxu0 0.0
        %1811 = vmatprep.subr.mxu0 0.0
        %1812 = vmatpush1.msra.mxu0 0.0
        %1813 = vmatprep.subr.mxu0 0.0
        %1814 = vmatpush1.msra.mxu0 0.0
        %1815 = vmatprep.subr.mxu0 0.0
        %1816 = vmatpush1.msra.mxu0 0.0
        %1817 = vmatprep.subr.mxu0 0.0
        %1818 = vmatpush1.msra.mxu0 0.0
        %1819 = vmatprep.subr.mxu0 0.0
        %1820 = vmatpush1.msra.mxu0 0.0
        %1821 = vmatprep.subr.mxu0 0.0
        %1822 = vmatpush1.msra.mxu0 0.0
        %1823 = vmatprep.subr.mxu0 0.0
        %1824 = vmatpush1.msra.mxu0 0.0
        %1825 = vmatprep.subr.mxu0 0.0
        %1826 = vmatpush1.msra.mxu0 0.0
        %1827 = vmatprep.subr.mxu0 0.0
        %1828 = vmatpush1.msra.mxu0 0.0
        %1829 = vmatprep.subr.mxu0 0.0
        %1830 = vmatpush1.msra.mxu0 0.0
        %1831 = vmatprep.subr.mxu0 0.0
        %1832 = vmatpush1.msra.mxu0 0.0
        %1833 = vmatprep.subr.mxu0 0.0
        %1834 = vmatpush1.msra.mxu0 0.0
        %1835 = vmatprep.subr.mxu0 0.0
        %1836 = vmatpush1.msra.mxu0 0.0
        %1837 = vmatprep.subr.mxu0 0.0
        %1838 = vmatpush1.msra.mxu0 0.0
        %1839 = vmatprep.mubr.f32.mxu0 0.0
        %v1840 = vand.u32 %v1268, 4294901760
        %1841 = vmatmul.mubr.f32.gmra.mrb[0].mxu0 %v1840
        %v1842 = vpop.f32.mrb[0].mxu0
        %v1843 = vadd.f32 %v1720, %v1842
        %v1844 = vpop.f32.mrb[0].mxu0
        %v1845 = vadd.f32 %v1722, %v1844
        %1846 = vmatprep.mubr.f32.mxu0 0.0
        %v1847 = vand.u32 %v1271, 4294901760
        %1848 = vmatmul.mubr.f32.gmra.mrb[0].mxu0 %v1847
        %v1849 = vpop.f32.mrb[0].mxu0
        %v1850 = vadd.f32 %v1729, %v1849
        %v1851 = vpop.f32.mrb[0].mxu0
        %v1852 = vadd.f32 %v1731, %v1851
        %1853 = vmatprep.mubr.f32.mxu0 0.0
        %v1854 = vand.u32 %v1274, 4294901760
        %1855 = vmatmul.mubr.f32.gmra.mrb[0].mxu0 %v1854
        %v1856 = vpop.f32.mrb[0].mxu0
        %v1857 = vadd.f32 %v1738, %v1856
        %v1858 = vpop.f32.mrb[0].mxu0
        %v1859 = vadd.f32 %v1740, %v1858
        %1860 = vmatprep.mubr.f32.mxu0 0.0
        %v1861 = vand.u32 %v1277, 4294901760
        %1862 = vmatmul.mubr.f32.gmra.mrb[0].mxu0 %v1861
        %v1863 = vpop.f32.mrb[0].mxu0
        %v1864 = vadd.f32 %v1747, %v1863
        %v1865 = vpop.f32.mrb[0].mxu0
        %v1866 = vadd.f32 %v1749, %v1865
        %1867 = vdwg.mxu0
        %v1868 = vand.u32 %v1232, 4294901760
        %1869 = vmatprep.subr.mxu0 %v1868
        %v1870 = vand.u32 %v1231, 4294901760
        %1871 = vmatpush1.msra.mxu0 %v1870
        %v1872 = vand.u32 %v1234, 4294901760
        %1873 = vmatprep.subr.mxu0 %v1872
        %v1874 = vand.u32 %v1233, 4294901760
        %1875 = vmatpush1.msra.mxu0 %v1874
        %v1876 = vand.u32 %v1236, 4294901760
        %1877 = vmatprep.subr.mxu0 %v1876
        %v1878 = vand.u32 %v1235, 4294901760
        %1879 = vmatpush1.msra.mxu0 %v1878
        %v1880 = vand.u32 %v1238, 4294901760
        %1881 = vmatprep.subr.mxu0 %v1880
        %v1882 = vand.u32 %v1237, 4294901760
        %1883 = vmatpush1.msra.mxu0 %v1882
        %1884 = vmatprep.subr.mxu0 0.0
        %1885 = vmatpush1.msra.mxu0 0.0
        %1886 = vmatprep.subr.mxu0 0.0
        %1887 = vmatpush1.msra.mxu0 0.0
        %1888 = vmatprep.subr.mxu0 0.0
        %1889 = vmatpush1.msra.mxu0 0.0
        %1890 = vmatprep.subr.mxu0 0.0
        %1891 = vmatpush1.msra.mxu0 0.0
        %1892 = vmatprep.subr.mxu0 0.0
        %1893 = vmatpush1.msra.mxu0 0.0
        %1894 = vmatprep.subr.mxu0 0.0
        %1895 = vmatpush1.msra.mxu0 0.0
        %1896 = vmatprep.subr.mxu0 0.0
        %1897 = vmatpush1.msra.mxu0 0.0
        %1898 = vmatprep.subr.mxu0 0.0
        %1899 = vmatpush1.msra.mxu0 0.0
        %1900 = vmatprep.subr.mxu0 0.0
        %1901 = vmatpush1.msra.mxu0 0.0
        %1902 = vmatprep.subr.mxu0 0.0
        %1903 = vmatpush1.msra.mxu0 0.0
        %1904 = vmatprep.subr.mxu0 0.0
        %1905 = vmatpush1.msra.mxu0 0.0
        %1906 = vmatprep.subr.mxu0 0.0
        %1907 = vmatpush1.msra.mxu0 0.0
        %1908 = vmatprep.subr.mxu0 0.0
        %1909 = vmatpush1.msra.mxu0 0.0
        %1910 = vmatprep.subr.mxu0 0.0
        %1911 = vmatpush1.msra.mxu0 0.0
        %1912 = vmatprep.subr.mxu0 0.0
        %1913 = vmatpush1.msra.mxu0 0.0
        %1914 = vmatprep.subr.mxu0 0.0
        %1915 = vmatpush1.msra.mxu0 0.0
        %1916 = vmatprep.subr.mxu0 0.0
        %1917 = vmatpush1.msra.mxu0 0.0
        %1918 = vmatprep.subr.mxu0 0.0
        %1919 = vmatpush1.msra.mxu0 0.0
        %1920 = vmatprep.subr.mxu0 0.0
        %1921 = vmatpush1.msra.mxu0 0.0
        %1922 = vmatprep.subr.mxu0 0.0
        %1923 = vmatpush1.msra.mxu0 0.0
        %1924 = vmatprep.subr.mxu0 0.0
        %1925 = vmatpush1.msra.mxu0 0.0
        %1926 = vmatprep.subr.mxu0 0.0
        %1927 = vmatpush1.msra.mxu0 0.0
        %1928 = vmatprep.subr.mxu0 0.0
        %1929 = vmatpush1.msra.mxu0 0.0
        %1930 = vmatprep.subr.mxu0 0.0
        %1931 = vmatpush1.msra.mxu0 0.0
        %1932 = vmatprep.subr.mxu0 0.0
        %1933 = vmatpush1.msra.mxu0 0.0
        %1934 = vmatprep.subr.mxu0 0.0
        %1935 = vmatpush1.msra.mxu0 0.0
        %1936 = vmatprep.subr.mxu0 0.0
        %1937 = vmatpush1.msra.mxu0 0.0
        %1938 = vmatprep.subr.mxu0 0.0
        %1939 = vmatpush1.msra.mxu0 0.0
        %1940 = vmatprep.mubr.f32.mxu0 0.0
        %v1941 = vand.u32 %v1268, 4294901760
        %1942 = vmatmul.mubr.f32.gmra.mrb[0].mxu0 %v1941
        %v1943 = vpop.f32.mrb[0].mxu0
        %v1944 = vadd.f32 %v1843, %v1943
        %v1945 = vpop.f32.mrb[0].mxu0
        %v1946 = vadd.f32 %v1845, %v1945
        %1947 = vmatprep.mubr.f32.mxu0 0.0
        %v1948 = vand.u32 %v1271, 4294901760
        %1949 = vmatmul.mubr.f32.gmra.mrb[0].mxu0 %v1948
        %v1950 = vpop.f32.mrb[0].mxu0
        %v1951 = vadd.f32 %v1850, %v1950
        %v1952 = vpop.f32.mrb[0].mxu0
        %v1953 = vadd.f32 %v1852, %v1952
        %1954 = vmatprep.mubr.f32.mxu0 0.0
        %v1955 = vand.u32 %v1274, 4294901760
        %1956 = vmatmul.mubr.f32.gmra.mrb[0].mxu0 %v1955
        %v1957 = vpop.f32.mrb[0].mxu0
        %v1958 = vadd.f32 %v1857, %v1957
        %v1959 = vpop.f32.mrb[0].mxu0
        %v1960 = vadd.f32 %v1859, %v1959
        %1961 = vmatprep.mubr.f32.mxu0 0.0
        %v1962 = vand.u32 %v1277, 4294901760
        %1963 = vmatmul.mubr.f32.gmra.mrb[0].mxu0 %v1962
        %v1964 = vpop.f32.mrb[0].mxu0
        %v1965 = vadd.f32 %v1864, %v1964
        %v1966 = vpop.f32.mrb[0].mxu0
        %v1967 = vadd.f32 %v1866, %v1966
        %1968 = vdwg.mxu0
        %v1969 = vmul.f32 %v1944, 0.5
        %v1970 = vmul.f32 %v1946, 0.5
        %v1971 = vmul.f32 %v1951, 0.5
        %v1972 = vmul.f32 %v1953, 0.5
        %v1973 = vmul.f32 %v1958, 0.5
        %v1974 = vmul.f32 %v1960, 0.5
        %v1975 = vmul.f32 %v1965, 0.5
        %v1976 = vmul.f32 %v1967, 0.5
        %v1977 = vmul.f32 %v1944, 0.044715
        %v1978 = vmul.f32 %v1946, 0.044715
        %v1979 = vmul.f32 %v1951, 0.044715
        %v1980 = vmul.f32 %v1953, 0.044715
        %v1981 = vmul.f32 %v1958, 0.044715
        %v1982 = vmul.f32 %v1960, 0.044715
        %v1983 = vmul.f32 %v1965, 0.044715
        %v1984 = vmul.f32 %v1967, 0.044715
        %v1985 = vmul.f32 %v1977, %v1944
        %v1986 = vmul.f32 %v1978, %v1946
        %v1987 = vmul.f32 %v1979, %v1951
        %v1988 = vmul.f32 %v1980, %v1953
        %v1989 = vmul.f32 %v1981, %v1958
        %v1990 = vmul.f32 %v1982, %v1960
        %v1991 = vmul.f32 %v1983, %v1965
        %v1992 = vmul.f32 %v1984, %v1967
        %v1993 = vmul.f32 %v1985, %v1944
        %v1994 = vmul.f32 %v1986, %v1946
        %v1995 = vmul.f32 %v1987, %v1951
        %v1996 = vmul.f32 %v1988, %v1953
        %v1997 = vmul.f32 %v1989, %v1958
        %v1998 = vmul.f32 %v1990, %v1960
        %v1999 = vmul.f32 %v1991, %v1965
        %v2000 = vmul.f32 %v1992, %v1967
        %v2001 = vadd.f32 %v1944, %v1993
        %v2002 = vadd.f32 %v1946, %v1994
        %v2003 = vadd.f32 %v1951, %v1995
        %v2004 = vadd.f32 %v1953, %v1996
        %v2005 = vadd.f32 %v1958, %v1997
        %v2006 = vadd.f32 %v1960, %v1998
        %v2007 = vadd.f32 %v1965, %v1999
        %v2008 = vadd.f32 %v1967, %v2000
        %v2009 = vmul.f32 %v2001, 0.7978846
        %v2010 = vmul.f32 %v2002, 0.7978846
        %v2011 = vmul.f32 %v2003, 0.7978846
        %v2012 = vmul.f32 %v2004, 0.7978846
        %v2013 = vmul.f32 %v2005, 0.7978846
        %v2014 = vmul.f32 %v2006, 0.7978846
        %v2015 = vmul.f32 %v2007, 0.7978846
        %v2016 = vmul.f32 %v2008, 0.7978846
        %v2017 = vtanh.pop %v2009
        %v2018 = vtanh.pop %v2010
        %v2019 = vtanh.pop %v2011
        %v2020 = vtanh.pop %v2012
        %v2021 = vtanh.pop %v2013
        %v2022 = vtanh.pop %v2014
        %v2023 = vtanh.pop %v2015
        %v2024 = vtanh.pop %v2016
        %v2025 = vadd.f32 %v2017, 1.0
        %v2026 = vadd.f32 %v2018, 1.0
        %v2027 = vadd.f32 %v2019, 1.0
        %v2028 = vadd.f32 %v2020, 1.0
        %v2029 = vadd.f32 %v2021, 1.0
        %v2030 = vadd.f32 %v2022, 1.0
        %v2031 = vadd.f32 %v2023, 1.0
        %v2032 = vadd.f32 %v2024, 1.0
        %v2033 = vmul.f32 %v1969, %v2025
        %v2034 = vmul.f32 %v1970, %v2026
        %v2035 = vmul.f32 %v1971, %v2027
        %v2036 = vmul.f32 %v1972, %v2028
        %v2037 = vmul.f32 %v1973, %v2029
        %v2038 = vmul.f32 %v1974, %v2030
        %v2039 = vmul.f32 %v1975, %v2031
        %v2040 = vmul.f32 %v1976, %v2032
        %v2041 = vld [vmem:[%s6] sm:$0xff]
        %v2042 = vld [vmem:[%s7] sm:$0xff]
        %2044 = vset.pattern.permute.xlu0 0
        %2045 = vperm.xlu0 %2044, %v2042
        %v2046 = vpop.permute.xlu0 %2045
        %v2049 = vsel %vm365, %v2041, 0
        %v2051 = vand.u32 %v2034, 4294901760
        %2052 = vmatprep.subr.mxu0 %v2051
        %v2053 = vand.u32 %v2033, 4294901760
        %2054 = vmatpush1.msra.mxu0 %v2053
        %v2055 = vand.u32 %v2036, 4294901760
        %2056 = vmatprep.subr.mxu0 %v2055
        %v2057 = vand.u32 %v2035, 4294901760
        %2058 = vmatpush1.msra.mxu0 %v2057
        %v2059 = vand.u32 %v2038, 4294901760
        %2060 = vmatprep.subr.mxu0 %v2059
        %v2061 = vand.u32 %v2037, 4294901760
        %2062 = vmatpush1.msra.mxu0 %v2061
        %v2063 = vand.u32 %v2040, 4294901760
        %2064 = vmatprep.subr.mxu0 %v2063
        %v2065 = vand.u32 %v2039, 4294901760
        %2066 = vmatpush1.msra.mxu0 %v2065
        %2067 = vmatprep.subr.mxu0 0.0
        %2068 = vmatpush1.msra.mxu0 0.0
        %2069 = vmatprep.subr.mxu0 0.0
        %2070 = vmatpush1.msra.mxu0 0.0
        %2071 = vmatprep.subr.mxu0 0.0
        %2072 = vmatpush1.msra.mxu0 0.0
        %2073 = vmatprep.subr.mxu0 0.0
        %2074 = vmatpush1.msra.mxu0 0.0
        %2075 = vmatprep.subr.mxu0 0.0
        %2076 = vmatpush1.msra.mxu0 0.0
        %2077 = vmatprep.subr.mxu0 0.0
        %2078 = vmatpush1.msra.mxu0 0.0
        %2079 = vmatprep.subr.mxu0 0.0
        %2080 = vmatpush1.msra.mxu0 0.0
        %2081 = vmatprep.subr.mxu0 0.0
        %2082 = vmatpush1.msra.mxu0 0.0
        %2083 = vmatprep.subr.mxu0 0.0
        %2084 = vmatpush1.msra.mxu0 0.0
        %2085 = vmatprep.subr.mxu0 0.0
        %2086 = vmatpush1.msra.mxu0 0.0
        %2087 = vmatprep.subr.mxu0 0.0
        %2088 = vmatpush1.msra.mxu0 0.0
        %2089 = vmatprep.subr.mxu0 0.0
        %2090 = vmatpush1.msra.mxu0 0.0
        %2091 = vmatprep.subr.mxu0 0.0
        %2092 = vmatpush1.msra.mxu0 0.0
        %2093 = vmatprep.subr.mxu0 0.0
        %2094 = vmatpush1.msra.mxu0 0.0
        %2095 = vmatprep.subr.mxu0 0.0
        %2096 = vmatpush1.msra.mxu0 0.0
        %2097 = vmatprep.subr.mxu0 0.0
        %2098 = vmatpush1.msra.mxu0 0.0
        %2099 = vmatprep.subr.mxu0 0.0
        %2100 = vmatpush1.msra.mxu0 0.0
        %2101 = vmatprep.subr.mxu0 0.0
        %2102 = vmatpush1.msra.mxu0 0.0
        %2103 = vmatprep.subr.mxu0 0.0
        %2104 = vmatpush1.msra.mxu0 0.0
        %2105 = vmatprep.subr.mxu0 0.0
        %2106 = vmatpush1.msra.mxu0 0.0
        %2107 = vmatprep.subr.mxu0 0.0
        %2108 = vmatpush1.msra.mxu0 0.0
        %2109 = vmatprep.subr.mxu0 0.0
        %2110 = vmatpush1.msra.mxu0 0.0
        %2111 = vmatprep.subr.mxu0 0.0
        %2112 = vmatpush1.msra.mxu0 0.0
        %2113 = vmatprep.subr.mxu0 0.0
        %2114 = vmatpush1.msra.mxu0 0.0
        %2115 = vmatprep.subr.mxu0 0.0
        %2116 = vmatpush1.msra.mxu0 0.0
        %2117 = vmatprep.subr.mxu0 0.0
        %2118 = vmatpush1.msra.mxu0 0.0
        %2119 = vmatprep.subr.mxu0 0.0
        %2120 = vmatpush1.msra.mxu0 0.0
        %2121 = vmatprep.subr.mxu0 0.0
        %2122 = vmatpush1.msra.mxu0 0.0
        %2123 = vmatprep.mubr.f32.mxu0 0.0
        %v2124 = vand.u32 %v2049, 4294901760
        %v2125 = vsub.f32 %v2049, %v2124
        %v2126 = vand.u32 %v2125, 4294901760
        %v2127 = vsub.f32 %v2125, %v2126
        %v2128 = vand.u32 %v2127, 4294901760
        %2129 = vmatmul.mubr.f32.gmra.mrb[0].mxu0 %v2128
        %v2130 = vpop.f32.mrb[0].mxu0
        %v2131 = vadd.f32 %v2046, %v2130
        %v2132 = vpop.f32.mrb[0].mxu0
        %v2133 = vadd.f32 %v2046, %v2132
        %2134 = vdwg.mxu0
        %v2135 = vand.u32 %v2034, 4294901760
        %v2136 = vsub.f32 %v2034, %v2135
        %v2137 = vand.u32 %v2136, 4294901760
        %v2138 = vsub.f32 %v2136, %v2137
        %v2139 = vand.u32 %v2138, 4294901760
        %2140 = vmatprep.subr.mxu0 %v2139
        %v2141 = vand.u32 %v2033, 4294901760
        %v2142 = vsub.f32 %v2033, %v2141
        %v2143 = vand.u32 %v2142, 4294901760
        %v2144 = vsub.f32 %v2142, %v2143
        %v2145 = vand.u32 %v2144, 4294901760
        %2146 = vmatpush1.msra.mxu0 %v2145
        %v2147 = vand.u32 %v2036, 4294901760
        %v2148 = vsub.f32 %v2036, %v2147
        %v2149 = vand.u32 %v2148, 4294901760
        %v2150 = vsub.f32 %v2148, %v2149
        %v2151 = vand.u32 %v2150, 4294901760
        %2152 = vmatprep.subr.mxu0 %v2151
        %v2153 = vand.u32 %v2035, 4294901760
        %v2154 = vsub.f32 %v2035, %v2153
        %v2155 = vand.u32 %v2154, 4294901760
        %v2156 = vsub.f32 %v2154, %v2155
        %v2157 = vand.u32 %v2156, 4294901760
        %2158 = vmatpush1.msra.mxu0 %v2157
        %v2159 = vand.u32 %v2038, 4294901760
        %v2160 = vsub.f32 %v2038, %v2159
        %v2161 = vand.u32 %v2160, 4294901760
        %v2162 = vsub.f32 %v2160, %v2161
        %v2163 = vand.u32 %v2162, 4294901760
        %2164 = vmatprep.subr.mxu0 %v2163
        %v2165 = vand.u32 %v2037, 4294901760
        %v2166 = vsub.f32 %v2037, %v2165
        %v2167 = vand.u32 %v2166, 4294901760
        %v2168 = vsub.f32 %v2166, %v2167
        %v2169 = vand.u32 %v2168, 4294901760
        %2170 = vmatpush1.msra.mxu0 %v2169
        %v2171 = vand.u32 %v2040, 4294901760
        %v2172 = vsub.f32 %v2040, %v2171
        %v2173 = vand.u32 %v2172, 4294901760
        %v2174 = vsub.f32 %v2172, %v2173
        %v2175 = vand.u32 %v2174, 4294901760
        %2176 = vmatprep.subr.mxu0 %v2175
        %v2177 = vand.u32 %v2039, 4294901760
        %v2178 = vsub.f32 %v2039, %v2177
        %v2179 = vand.u32 %v2178, 4294901760
        %v2180 = vsub.f32 %v2178, %v2179
        %v2181 = vand.u32 %v2180, 4294901760
        %2182 = vmatpush1.msra.mxu0 %v2181
        %2183 = vmatprep.subr.mxu0 0.0
        %2184 = vmatpush1.msra.mxu0 0.0
        %2185 = vmatprep.subr.mxu0 0.0
        %2186 = vmatpush1.msra.mxu0 0.0
        %2187 = vmatprep.subr.mxu0 0.0
        %2188 = vmatpush1.msra.mxu0 0.0
        %2189 = vmatprep.subr.mxu0 0.0
        %2190 = vmatpush1.msra.mxu0 0.0
        %2191 = vmatprep.subr.mxu0 0.0
        %2192 = vmatpush1.msra.mxu0 0.0
        %2193 = vmatprep.subr.mxu0 0.0
        %2194 = vmatpush1.msra.mxu0 0.0
        %2195 = vmatprep.subr.mxu0 0.0
        %2196 = vmatpush1.msra.mxu0 0.0
        %2197 = vmatprep.subr.mxu0 0.0
        %2198 = vmatpush1.msra.mxu0 0.0
        %2199 = vmatprep.subr.mxu0 0.0
        %2200 = vmatpush1.msra.mxu0 0.0
        %2201 = vmatprep.subr.mxu0 0.0
        %2202 = vmatpush1.msra.mxu0 0.0
        %2203 = vmatprep.subr.mxu0 0.0
        %2204 = vmatpush1.msra.mxu0 0.0
        %2205 = vmatprep.subr.mxu0 0.0
        %2206 = vmatpush1.msra.mxu0 0.0
        %2207 = vmatprep.subr.mxu0 0.0
        %2208 = vmatpush1.msra.mxu0 0.0
        %2209 = vmatprep.subr.mxu0 0.0
        %2210 = vmatpush1.msra.mxu0 0.0
        %2211 = vmatprep.subr.mxu0 0.0
        %2212 = vmatpush1.msra.mxu0 0.0
        %2213 = vmatprep.subr.mxu0 0.0
        %2214 = vmatpush1.msra.mxu0 0.0
        %2215 = vmatprep.subr.mxu0 0.0
        %2216 = vmatpush1.msra.mxu0 0.0
        %2217 = vmatprep.subr.mxu0 0.0
        %2218 = vmatpush1.msra.mxu0 0.0
        %2219 = vmatprep.subr.mxu0 0.0
        %2220 = vmatpush1.msra.mxu0 0.0
        %2221 = vmatprep.subr.mxu0 0.0
        %2222 = vmatpush1.msra.mxu0 0.0
        %2223 = vmatprep.subr.mxu0 0.0
        %2224 = vmatpush1.msra.mxu0 0.0
        %2225 = vmatprep.subr.mxu0 0.0
        %2226 = vmatpush1.msra.mxu0 0.0
        %2227 = vmatprep.subr.mxu0 0.0
        %2228 = vmatpush1.msra.mxu0 0.0
        %2229 = vmatprep.subr.mxu0 0.0
        %2230 = vmatpush1.msra.mxu0 0.0
        %2231 = vmatprep.subr.mxu0 0.0
        %2232 = vmatpush1.msra.mxu0 0.0
        %2233 = vmatprep.subr.mxu0 0.0
        %2234 = vmatpush1.msra.mxu0 0.0
        %2235 = vmatprep.subr.mxu0 0.0
        %2236 = vmatpush1.msra.mxu0 0.0
        %2237 = vmatprep.subr.mxu0 0.0
        %2238 = vmatpush1.msra.mxu0 0.0
        %2239 = vmatprep.mubr.f32.mxu0 0.0
        %v2240 = vand.u32 %v2049, 4294901760
        %2241 = vmatmul.mubr.f32.gmra.mrb[0].mxu0 %v2240
        %v2242 = vpop.f32.mrb[0].mxu0
        %v2243 = vadd.f32 %v2131, %v2242
        %v2244 = vpop.f32.mrb[0].mxu0
        %v2245 = vadd.f32 %v2133, %v2244
        %2246 = vdwg.mxu0
        %v2247 = vand.u32 %v2034, 4294901760
        %v2248 = vsub.f32 %v2034, %v2247
        %2249 = vmatprep.subr.mxu0 %v2248
        %v2250 = vand.u32 %v2033, 4294901760
        %v2251 = vsub.f32 %v2033, %v2250
        %2252 = vmatpush1.msra.mxu0 %v2251
        %v2253 = vand.u32 %v2036, 4294901760
        %v2254 = vsub.f32 %v2036, %v2253
        %2255 = vmatprep.subr.mxu0 %v2254
        %v2256 = vand.u32 %v2035, 4294901760
        %v2257 = vsub.f32 %v2035, %v2256
        %2258 = vmatpush1.msra.mxu0 %v2257
        %v2259 = vand.u32 %v2038, 4294901760
        %v2260 = vsub.f32 %v2038, %v2259
        %2261 = vmatprep.subr.mxu0 %v2260
        %v2262 = vand.u32 %v2037, 4294901760
        %v2263 = vsub.f32 %v2037, %v2262
        %2264 = vmatpush1.msra.mxu0 %v2263
        %v2265 = vand.u32 %v2040, 4294901760
        %v2266 = vsub.f32 %v2040, %v2265
        %2267 = vmatprep.subr.mxu0 %v2266
        %v2268 = vand.u32 %v2039, 4294901760
        %v2269 = vsub.f32 %v2039, %v2268
        %2270 = vmatpush1.msra.mxu0 %v2269
        %2271 = vmatprep.subr.mxu0 0.0
        %2272 = vmatpush1.msra.mxu0 0.0
        %2273 = vmatprep.subr.mxu0 0.0
        %2274 = vmatpush1.msra.mxu0 0.0
        %2275 = vmatprep.subr.mxu0 0.0
        %2276 = vmatpush1.msra.mxu0 0.0
        %2277 = vmatprep.subr.mxu0 0.0
        %2278 = vmatpush1.msra.mxu0 0.0
        %2279 = vmatprep.subr.mxu0 0.0
        %2280 = vmatpush1.msra.mxu0 0.0
        %2281 = vmatprep.subr.mxu0 0.0
        %2282 = vmatpush1.msra.mxu0 0.0
        %2283 = vmatprep.subr.mxu0 0.0
        %2284 = vmatpush1.msra.mxu0 0.0
        %2285 = vmatprep.subr.mxu0 0.0
        %2286 = vmatpush1.msra.mxu0 0.0
        %2287 = vmatprep.subr.mxu0 0.0
        %2288 = vmatpush1.msra.mxu0 0.0
        %2289 = vmatprep.subr.mxu0 0.0
        %2290 = vmatpush1.msra.mxu0 0.0
        %2291 = vmatprep.subr.mxu0 0.0
        %2292 = vmatpush1.msra.mxu0 0.0
        %2293 = vmatprep.subr.mxu0 0.0
        %2294 = vmatpush1.msra.mxu0 0.0
        %2295 = vmatprep.subr.mxu0 0.0
        %2296 = vmatpush1.msra.mxu0 0.0
        %2297 = vmatprep.subr.mxu0 0.0
        %2298 = vmatpush1.msra.mxu0 0.0
        %2299 = vmatprep.subr.mxu0 0.0
        %2300 = vmatpush1.msra.mxu0 0.0
        %2301 = vmatprep.subr.mxu0 0.0
        %2302 = vmatpush1.msra.mxu0 0.0
        %2303 = vmatprep.subr.mxu0 0.0
        %2304 = vmatpush1.msra.mxu0 0.0
        %2305 = vmatprep.subr.mxu0 0.0
        %2306 = vmatpush1.msra.mxu0 0.0
        %2307 = vmatprep.subr.mxu0 0.0
        %2308 = vmatpush1.msra.mxu0 0.0
        %2309 = vmatprep.subr.mxu0 0.0
        %2310 = vmatpush1.msra.mxu0 0.0
        %2311 = vmatprep.subr.mxu0 0.0
        %2312 = vmatpush1.msra.mxu0 0.0
        %2313 = vmatprep.subr.mxu0 0.0
        %2314 = vmatpush1.msra.mxu0 0.0
        %2315 = vmatprep.subr.mxu0 0.0
        %2316 = vmatpush1.msra.mxu0 0.0
        %2317 = vmatprep.subr.mxu0 0.0
        %2318 = vmatpush1.msra.mxu0 0.0
        %2319 = vmatprep.subr.mxu0 0.0
        %2320 = vmatpush1.msra.mxu0 0.0
        %2321 = vmatprep.subr.mxu0 0.0
        %2322 = vmatpush1.msra.mxu0 0.0
        %2323 = vmatprep.subr.mxu0 0.0
        %2324 = vmatpush1.msra.mxu0 0.0
        %2325 = vmatprep.subr.mxu0 0.0
        %2326 = vmatpush1.msra.mxu0 0.0
        %2327 = vmatprep.mubr.f32.mxu0 0.0
        %v2328 = vand.u32 %v2049, 4294901760
        %v2329 = vsub.f32 %v2049, %v2328
        %2330 = vmatmul.mubr.f32.gmra.mrb[0].mxu0 %v2329
        %v2331 = vpop.f32.mrb[0].mxu0
        %v2332 = vadd.f32 %v2243, %v2331
        %v2333 = vpop.f32.mrb[0].mxu0
        %v2334 = vadd.f32 %v2245, %v2333
        %2335 = vdwg.mxu0
        %v2336 = vand.u32 %v2034, 4294901760
        %2337 = vmatprep.subr.mxu0 %v2336
        %v2338 = vand.u32 %v2033, 4294901760
        %2339 = vmatpush1.msra.mxu0 %v2338
        %v2340 = vand.u32 %v2036, 4294901760
        %2341 = vmatprep.subr.mxu0 %v2340
        %v2342 = vand.u32 %v2035, 4294901760
        %2343 = vmatpush1.msra.mxu0 %v2342
        %v2344 = vand.u32 %v2038, 4294901760
        %2345 = vmatprep.subr.mxu0 %v2344
        %v2346 = vand.u32 %v2037, 4294901760
        %2347 = vmatpush1.msra.mxu0 %v2346
        %v2348 = vand.u32 %v2040, 4294901760
        %2349 = vmatprep.subr.mxu0 %v2348
        %v2350 = vand.u32 %v2039, 4294901760
        %2351 = vmatpush1.msra.mxu0 %v2350
        %2352 = vmatprep.subr.mxu0 0.0
        %2353 = vmatpush1.msra.mxu0 0.0
        %2354 = vmatprep.subr.mxu0 0.0
        %2355 = vmatpush1.msra.mxu0 0.0
        %2356 = vmatprep.subr.mxu0 0.0
        %2357 = vmatpush1.msra.mxu0 0.0
        %2358 = vmatprep.subr.mxu0 0.0
        %2359 = vmatpush1.msra.mxu0 0.0
        %2360 = vmatprep.subr.mxu0 0.0
        %2361 = vmatpush1.msra.mxu0 0.0
        %2362 = vmatprep.subr.mxu0 0.0
        %2363 = vmatpush1.msra.mxu0 0.0
        %2364 = vmatprep.subr.mxu0 0.0
        %2365 = vmatpush1.msra.mxu0 0.0
        %2366 = vmatprep.subr.mxu0 0.0
        %2367 = vmatpush1.msra.mxu0 0.0
        %2368 = vmatprep.subr.mxu0 0.0
        %2369 = vmatpush1.msra.mxu0 0.0
        %2370 = vmatprep.subr.mxu0 0.0
        %2371 = vmatpush1.msra.mxu0 0.0
        %2372 = vmatprep.subr.mxu0 0.0
        %2373 = vmatpush1.msra.mxu0 0.0
        %2374 = vmatprep.subr.mxu0 0.0
        %2375 = vmatpush1.msra.mxu0 0.0
        %2376 = vmatprep.subr.mxu0 0.0
        %2377 = vmatpush1.msra.mxu0 0.0
        %2378 = vmatprep.subr.mxu0 0.0
        %2379 = vmatpush1.msra.mxu0 0.0
        %2380 = vmatprep.subr.mxu0 0.0
        %2381 = vmatpush1.msra.mxu0 0.0
        %2382 = vmatprep.subr.mxu0 0.0
        %2383 = vmatpush1.msra.mxu0 0.0
        %2384 = vmatprep.subr.mxu0 0.0
        %2385 = vmatpush1.msra.mxu0 0.0
        %2386 = vmatprep.subr.mxu0 0.0
        %2387 = vmatpush1.msra.mxu0 0.0
        %2388 = vmatprep.subr.mxu0 0.0
        %2389 = vmatpush1.msra.mxu0 0.0
        %2390 = vmatprep.subr.mxu0 0.0
        %2391 = vmatpush1.msra.mxu0 0.0
        %2392 = vmatprep.subr.mxu0 0.0
        %2393 = vmatpush1.msra.mxu0 0.0
        %2394 = vmatprep.subr.mxu0 0.0
        %2395 = vmatpush1.msra.mxu0 0.0
        %2396 = vmatprep.subr.mxu0 0.0
        %2397 = vmatpush1.msra.mxu0 0.0
        %2398 = vmatprep.subr.mxu0 0.0
        %2399 = vmatpush1.msra.mxu0 0.0
        %2400 = vmatprep.subr.mxu0 0.0
        %2401 = vmatpush1.msra.mxu0 0.0
        %2402 = vmatprep.subr.mxu0 0.0
        %2403 = vmatpush1.msra.mxu0 0.0
        %2404 = vmatprep.subr.mxu0 0.0
        %2405 = vmatpush1.msra.mxu0 0.0
        %2406 = vmatprep.subr.mxu0 0.0
        %2407 = vmatpush1.msra.mxu0 0.0
        %2408 = vmatprep.mubr.f32.mxu0 0.0
        %v2409 = vand.u32 %v2049, 4294901760
        %v2410 = vsub.f32 %v2049, %v2409
        %v2411 = vand.u32 %v2410, 4294901760
        %2412 = vmatmul.mubr.f32.gmra.mrb[0].mxu0 %v2411
        %v2413 = vpop.f32.mrb[0].mxu0
        %v2414 = vadd.f32 %v2332, %v2413
        %v2415 = vpop.f32.mrb[0].mxu0
        %v2416 = vadd.f32 %v2334, %v2415
        %2417 = vdwg.mxu0
        %v2418 = vand.u32 %v2034, 4294901760
        %v2419 = vsub.f32 %v2034, %v2418
        %v2420 = vand.u32 %v2419, 4294901760
        %2421 = vmatprep.subr.mxu0 %v2420
        %v2422 = vand.u32 %v2033, 4294901760
        %v2423 = vsub.f32 %v2033, %v2422
        %v2424 = vand.u32 %v2423, 4294901760
        %2425 = vmatpush1.msra.mxu0 %v2424
        %v2426 = vand.u32 %v2036, 4294901760
        %v2427 = vsub.f32 %v2036, %v2426
        %v2428 = vand.u32 %v2427, 4294901760
        %2429 = vmatprep.subr.mxu0 %v2428
        %v2430 = vand.u32 %v2035, 4294901760
        %v2431 = vsub.f32 %v2035, %v2430
        %v2432 = vand.u32 %v2431, 4294901760
        %2433 = vmatpush1.msra.mxu0 %v2432
        %v2434 = vand.u32 %v2038, 4294901760
        %v2435 = vsub.f32 %v2038, %v2434
        %v2436 = vand.u32 %v2435, 4294901760
        %2437 = vmatprep.subr.mxu0 %v2436
        %v2438 = vand.u32 %v2037, 4294901760
        %v2439 = vsub.f32 %v2037, %v2438
        %v2440 = vand.u32 %v2439, 4294901760
        %2441 = vmatpush1.msra.mxu0 %v2440
        %v2442 = vand.u32 %v2040, 4294901760
        %v2443 = vsub.f32 %v2040, %v2442
        %v2444 = vand.u32 %v2443, 4294901760
        %2445 = vmatprep.subr.mxu0 %v2444
        %v2446 = vand.u32 %v2039, 4294901760
        %v2447 = vsub.f32 %v2039, %v2446
        %v2448 = vand.u32 %v2447, 4294901760
        %2449 = vmatpush1.msra.mxu0 %v2448
        %2450 = vmatprep.subr.mxu0 0.0
        %2451 = vmatpush1.msra.mxu0 0.0
        %2452 = vmatprep.subr.mxu0 0.0
        %2453 = vmatpush1.msra.mxu0 0.0
        %2454 = vmatprep.subr.mxu0 0.0
        %2455 = vmatpush1.msra.mxu0 0.0
        %2456 = vmatprep.subr.mxu0 0.0
        %2457 = vmatpush1.msra.mxu0 0.0
        %2458 = vmatprep.subr.mxu0 0.0
        %2459 = vmatpush1.msra.mxu0 0.0
        %2460 = vmatprep.subr.mxu0 0.0
        %2461 = vmatpush1.msra.mxu0 0.0
        %2462 = vmatprep.subr.mxu0 0.0
        %2463 = vmatpush1.msra.mxu0 0.0
        %2464 = vmatprep.subr.mxu0 0.0
        %2465 = vmatpush1.msra.mxu0 0.0
        %2466 = vmatprep.subr.mxu0 0.0
        %2467 = vmatpush1.msra.mxu0 0.0
        %2468 = vmatprep.subr.mxu0 0.0
        %2469 = vmatpush1.msra.mxu0 0.0
        %2470 = vmatprep.subr.mxu0 0.0
        %2471 = vmatpush1.msra.mxu0 0.0
        %2472 = vmatprep.subr.mxu0 0.0
        %2473 = vmatpush1.msra.mxu0 0.0
        %2474 = vmatprep.subr.mxu0 0.0
        %2475 = vmatpush1.msra.mxu0 0.0
        %2476 = vmatprep.subr.mxu0 0.0
        %2477 = vmatpush1.msra.mxu0 0.0
        %2478 = vmatprep.subr.mxu0 0.0
        %2479 = vmatpush1.msra.mxu0 0.0
        %2480 = vmatprep.subr.mxu0 0.0
        %2481 = vmatpush1.msra.mxu0 0.0
        %2482 = vmatprep.subr.mxu0 0.0
        %2483 = vmatpush1.msra.mxu0 0.0
        %2484 = vmatprep.subr.mxu0 0.0
        %2485 = vmatpush1.msra.mxu0 0.0
        %2486 = vmatprep.subr.mxu0 0.0
        %2487 = vmatpush1.msra.mxu0 0.0
        %2488 = vmatprep.subr.mxu0 0.0
        %2489 = vmatpush1.msra.mxu0 0.0
        %2490 = vmatprep.subr.mxu0 0.0
        %2491 = vmatpush1.msra.mxu0 0.0
        %2492 = vmatprep.subr.mxu0 0.0
        %2493 = vmatpush1.msra.mxu0 0.0
        %2494 = vmatprep.subr.mxu0 0.0
        %2495 = vmatpush1.msra.mxu0 0.0
        %2496 = vmatprep.subr.mxu0 0.0
        %2497 = vmatpush1.msra.mxu0 0.0
        %2498 = vmatprep.subr.mxu0 0.0
        %2499 = vmatpush1.msra.mxu0 0.0
        %2500 = vmatprep.subr.mxu0 0.0
        %2501 = vmatpush1.msra.mxu0 0.0
        %2502 = vmatprep.subr.mxu0 0.0
        %2503 = vmatpush1.msra.mxu0 0.0
        %2504 = vmatprep.subr.mxu0 0.0
        %2505 = vmatpush1.msra.mxu0 0.0
        %2506 = vmatprep.mubr.f32.mxu0 0.0
        %v2507 = vand.u32 %v2049, 4294901760
        %2508 = vmatmul.mubr.f32.gmra.mrb[0].mxu0 %v2507
        %v2509 = vpop.f32.mrb[0].mxu0
        %v2510 = vadd.f32 %v2414, %v2509
        %v2511 = vpop.f32.mrb[0].mxu0
        %v2512 = vadd.f32 %v2416, %v2511
        %2513 = vdwg.mxu0
        %v2514 = vand.u32 %v2034, 4294901760
        %2515 = vmatprep.subr.mxu0 %v2514
        %v2516 = vand.u32 %v2033, 4294901760
        %2517 = vmatpush1.msra.mxu0 %v2516
        %v2518 = vand.u32 %v2036, 4294901760
        %2519 = vmatprep.subr.mxu0 %v2518
        %v2520 = vand.u32 %v2035, 4294901760
        %2521 = vmatpush1.msra.mxu0 %v2520
        %v2522 = vand.u32 %v2038, 4294901760
        %2523 = vmatprep.subr.mxu0 %v2522
        %v2524 = vand.u32 %v2037, 4294901760
        %2525 = vmatpush1.msra.mxu0 %v2524
        %v2526 = vand.u32 %v2040, 4294901760
        %2527 = vmatprep.subr.mxu0 %v2526
        %v2528 = vand.u32 %v2039, 4294901760
        %2529 = vmatpush1.msra.mxu0 %v2528
        %2530 = vmatprep.subr.mxu0 0.0
        %2531 = vmatpush1.msra.mxu0 0.0
        %2532 = vmatprep.subr.mxu0 0.0
        %2533 = vmatpush1.msra.mxu0 0.0
        %2534 = vmatprep.subr.mxu0 0.0
        %2535 = vmatpush1.msra.mxu0 0.0
        %2536 = vmatprep.subr.mxu0 0.0
        %2537 = vmatpush1.msra.mxu0 0.0
        %2538 = vmatprep.subr.mxu0 0.0
        %2539 = vmatpush1.msra.mxu0 0.0
        %2540 = vmatprep.subr.mxu0 0.0
        %2541 = vmatpush1.msra.mxu0 0.0
        %2542 = vmatprep.subr.mxu0 0.0
        %2543 = vmatpush1.msra.mxu0 0.0
        %2544 = vmatprep.subr.mxu0 0.0
        %2545 = vmatpush1.msra.mxu0 0.0
        %2546 = vmatprep.subr.mxu0 0.0
        %2547 = vmatpush1.msra.mxu0 0.0
        %2548 = vmatprep.subr.mxu0 0.0
        %2549 = vmatpush1.msra.mxu0 0.0
        %2550 = vmatprep.subr.mxu0 0.0
        %2551 = vmatpush1.msra.mxu0 0.0
        %2552 = vmatprep.subr.mxu0 0.0
        %2553 = vmatpush1.msra.mxu0 0.0
        %2554 = vmatprep.subr.mxu0 0.0
        %2555 = vmatpush1.msra.mxu0 0.0
        %2556 = vmatprep.subr.mxu0 0.0
        %2557 = vmatpush1.msra.mxu0 0.0
        %2558 = vmatprep.subr.mxu0 0.0
        %2559 = vmatpush1.msra.mxu0 0.0
        %2560 = vmatprep.subr.mxu0 0.0
        %2561 = vmatpush1.msra.mxu0 0.0
        %2562 = vmatprep.subr.mxu0 0.0
        %2563 = vmatpush1.msra.mxu0 0.0
        %2564 = vmatprep.subr.mxu0 0.0
        %2565 = vmatpush1.msra.mxu0 0.0
        %2566 = vmatprep.subr.mxu0 0.0
        %2567 = vmatpush1.msra.mxu0 0.0
        %2568 = vmatprep.subr.mxu0 0.0
        %2569 = vmatpush1.msra.mxu0 0.0
        %2570 = vmatprep.subr.mxu0 0.0
        %2571 = vmatpush1.msra.mxu0 0.0
        %2572 = vmatprep.subr.mxu0 0.0
        %2573 = vmatpush1.msra.mxu0 0.0
        %2574 = vmatprep.subr.mxu0 0.0
        %2575 = vmatpush1.msra.mxu0 0.0
        %2576 = vmatprep.subr.mxu0 0.0
        %2577 = vmatpush1.msra.mxu0 0.0
        %2578 = vmatprep.subr.mxu0 0.0
        %2579 = vmatpush1.msra.mxu0 0.0
        %2580 = vmatprep.subr.mxu0 0.0
        %2581 = vmatpush1.msra.mxu0 0.0
        %2582 = vmatprep.subr.mxu0 0.0
        %2583 = vmatpush1.msra.mxu0 0.0
        %2584 = vmatprep.subr.mxu0 0.0
        %2585 = vmatpush1.msra.mxu0 0.0
        %2586 = vmatprep.mubr.f32.mxu0 0.0
        %v2587 = vand.u32 %v2049, 4294901760
        %2588 = vmatmul.mubr.f32.gmra.mrb[0].mxu0 %v2587
        %v2589 = vpop.f32.mrb[0].mxu0
        %v2590 = vadd.f32 %v2510, %v2589
        %v2591 = vpop.f32.mrb[0].mxu0
        %v2592 = vadd.f32 %v2512, %v2591
        %2593 = vdwg.mxu0
        %2594 = vst [vmem:[%s336] sm:$0xff] %v2590
        %2595 = vst [vmem:[%s336 + $0x8] sm:$0xff] %v2592
        %s2596 = sand.u32 %s224, 1
        %s2597 = scalar_lea.sflag [#allocation3], %s2596
        %s2598 = sand.u32 %s224, 1
        %s2599 = smul.addr %s2598, 16
        %s2600 = scalar_lea.vmem [#allocation2], %s2599
        // Predicated region
        $region53: #{tpu_custom_call.1} parent=51 // pred_check
          %p2601 = pneg %p234
        $region54: #{tpu_custom_call.1} parent=51 // pred_check_branch
          %2603 = sbr.rel (%p2601) target = $region56
        $region55: #{tpu_custom_call.1} parent=51 // pred_region
          %s2604 = smul.u32 2, %s27
          %s2606 = ssub.s32 256, 256
          %2607 = vsyncadd %s2597, %s2606
          %s2608 = smul.addr %s26, 2
          %s2609 = sadd.s32 %s2604, %s2608
          %s2610 = smul.addr %s2609, 128
          %s2611 = scalar_lea.hbm %s8, %s2610
          %s2613 = sshll.u32 %s2600, 4
          %s2614 = int_to_ptr.vmem [resolvable:$true] %s2613
          %2616 = dma.vmem_to_hbm [thread:$0]  %s2614, 256, %s2611, %s2597
        $region56: #{tpu_custom_call.1} parent=51 // pred_fallthru
          _
      $region52: #{tpu_custom_call.1} parent=5 // pred_fallthru
        _
      %p2617 = scmp.le.s32.totalorder 2, %s17
      // Predicated region
      $region57: #{tpu_custom_call.1} parent=5 // pred_check
        %p2618 = pneg %p2617
      $region58: #{tpu_custom_call.1} parent=5 // pred_check_branch
        %2620 = sbr.rel (%p2618) target = $region60
      $region59: #{tpu_custom_call.1} parent=5 // pred_region
        %s2621 = ssub.s32 %s17, 2
        // Predicated region
        $region61: #{tpu_custom_call.1} parent=59 // pred_check
          %p2622 = pneg %p240
        $region62: #{tpu_custom_call.1} parent=59 // pred_check_branch
          %2624 = sbr.rel (%p2622) target = $region64
        $region63: #{tpu_custom_call.1} parent=59 // pred_region
          %s2625 = sand.u32 %s225, 1
          %s2626 = scalar_lea.sflag [#allocation3], %s2625
          %s2627 = sand.u32 %s225, 1
          %s2628 = smul.addr %s2627, 16
          %s2629 = scalar_lea.vmem [#allocation2], %s2628
          %2630 = dma.done %s2626, 256
        $region64: #{tpu_custom_call.1} parent=59 // pred_fallthru
          _
      $region60: #{tpu_custom_call.1} parent=5 // pred_fallthru
        _
    $region6: #{tpu_custom_call.1} parent=1 // loop_footer
      %s21 = sadd.s32 1, %s17
    $region7: #{tpu_custom_call.1} parent=1 // loop_footer_branch
      %16 = sbr.rel target = $region3
    $region8: #{tpu_custom_call.1} parent=1 // loop_exit
      _
    %2631 = vsyncpa [#allocation3], 1
    %s2632 = scalar_lea.sflag [#allocation3], 1
    %2633 = vsyncpa %s2632, 1

</llo_original>
